<compile_context>
chip_gen: v7x
topology: tpu7x:2x2x1
jax: 0.10.0
libtpu: 0.0.40
codegen_flags: <defaults>
</compile_context>

<pallas_src>
import functools

import jax
import jax.numpy as jnp
from jax.experimental import pallas as pl
from jax.experimental.pallas import tpu as pltpu

EPS = 1e-5
SLOPE = 0.1            # LeakyReLU negative slope
VMEM_LIMIT = 64 * 1024 * 1024


def _round_up(x, m):
    return (x + m - 1) // m * m


# --------------------------------------------------------------------------
# Kernel 1: tiled GEMM (bf16 MXU, f32 acc) + per-column sum / sum-of-squares
#           accumulated across the row-tile grid axis ("arbitrary").
# --------------------------------------------------------------------------
def _gemm_stats_kernel(p_ref, w_ref, y_ref, sum_ref, sq_ref):
    y = jnp.dot(p_ref[...], w_ref[...], preferred_element_type=jnp.float32)
    y_ref[...] = y

    @pl.when(pl.program_id(0) == 0)
    def _():
        sum_ref[...] = jnp.zeros_like(sum_ref)
        sq_ref[...] = jnp.zeros_like(sq_ref)

    # Single-pass stats: zero-padded rows contribute nothing, so accumulating
    # over the padded Mp rows and dividing by the true M on the host is exact.
    sum_ref[...] += jnp.sum(y, axis=0, keepdims=True)
    sq_ref[...] += jnp.sum(y * y, axis=0, keepdims=True)


# --------------------------------------------------------------------------
# Kernel 2: y*scale + shift  [+ residual]  [+ LeakyReLU]   ("parallel" tiles)
# --------------------------------------------------------------------------
def _make_affine_kernel(has_residual: bool, apply_relu: bool):
    def kernel(*refs):
        if has_residual:
            y_ref, ss_ref, r_ref, o_ref = refs
        else:
            y_ref, ss_ref, o_ref = refs
        scale = ss_ref[0:1, :]
        shift = ss_ref[1:2, :]
        out = y_ref[...] * scale + shift
        if has_residual:
            out = out + r_ref[...]
        if apply_relu:
            out = jnp.maximum(out, SLOPE * out)
        o_ref[...] = out
    return kernel


# --------------------------------------------------------------------------
# Wrapper: conv-as-GEMM + training-mode BatchNorm [+ residual] [+ LeakyReLU]
# --------------------------------------------------------------------------
def conv_bn_pallas(patches, w, gamma, beta, residual=None, apply_relu=True,
                   gemm_dtype=jnp.bfloat16):
    """patches: (M, K) f32, w: (K, C) f32, residual: (M, C) f32 or None.
    Returns (M, C) f32.  Conv bias is intentionally absent (cancels in BN)."""
    M, K = patches.shape
    C = w.shape[1]

    Cpad = _round_up(max(C, 128), 128)          # lane-dense output
    tm = min(512, _round_up(M, 8))              # row-tile size
    Mp = _round_up(M, tm)
    grid_m = Mp // tm

    p = jnp.pad(patches.astype(gemm_dtype), ((0, Mp - M), (0, 0)))
    wp = jnp.pad(w.astype(gemm_dtype), ((0, 0), (0, Cpad - C)))

    # ---- pass 1: GEMM + column sum / sumsq accumulation ----
    gemm_bytes = (p.size * 2 + wp.size * 2 + Mp * Cpad * 4 + 2 * Cpad * 4)
    y, colsum, colsq = pl.pallas_call(
        _gemm_stats_kernel,
        out_shape=(jax.ShapeDtypeStruct((Mp, Cpad), jnp.float32),
                   jax.ShapeDtypeStruct((1, Cpad), jnp.float32),
                   jax.ShapeDtypeStruct((1, Cpad), jnp.float32)),
        grid=(grid_m,),
        in_specs=[pl.BlockSpec((tm, K), lambda i: (i, 0)),
                  pl.BlockSpec((K, Cpad), lambda i: (0, 0))],
        out_specs=(pl.BlockSpec((tm, Cpad), lambda i: (i, 0)),
                   pl.BlockSpec((1, Cpad), lambda i: (0, 0)),
                   pl.BlockSpec((1, Cpad), lambda i: (0, 0))),
        compiler_params=pltpu.CompilerParams(
            dimension_semantics=("arbitrary",),
            vmem_limit_bytes=VMEM_LIMIT),
        cost_estimate=pl.CostEstimate(
            flops=2 * Mp * K * Cpad, transcendentals=0,
            bytes_accessed=gemm_bytes),
    )(p, wp)

    # ---- tiny host-side finalize: fold BN into per-channel scale/shift ----
    mean = colsum[0] / M
    var = jnp.maximum(colsq[0] / M - mean * mean, 0.0)
    gpad = jnp.zeros((Cpad,), jnp.float32).at[:C].set(gamma.astype(jnp.float32))
    bpad = jnp.zeros((Cpad,), jnp.float32).at[:C].set(beta.astype(jnp.float32))
    scale = gpad * jax.lax.rsqrt(var + EPS)
    shift = bpad - mean * scale
    ss = jnp.zeros((8, Cpad), jnp.float32).at[0].set(scale).at[1].set(shift)

    # ---- pass 2: normalize + residual + LeakyReLU (row-parallel) ----
    inputs = [y, ss]
    in_specs = [pl.BlockSpec((tm, Cpad), lambda i: (i, 0)),
                pl.BlockSpec((8, Cpad), lambda i: (0, 0))]
    if residual is not None:
        rpad = jnp.zeros((Mp, Cpad), jnp.float32).at[:M, :C].set(
            residual.astype(jnp.float32))
        inputs.append(rpad)
        in_specs.append(pl.BlockSpec((tm, Cpad), lambda i: (i, 0)))

    out = pl.pallas_call(
        _make_affine_kernel(residual is not None, apply_relu),
        out_shape=jax.ShapeDtypeStruct((Mp, Cpad), jnp.float32),
        grid=(grid_m,),
        in_specs=in_specs,
        out_specs=pl.BlockSpec((tm, Cpad), lambda i: (i, 0)),
        compiler_params=pltpu.CompilerParams(
            dimension_semantics=("parallel",),
            vmem_limit_bytes=VMEM_LIMIT),
        cost_estimate=pl.CostEstimate(
            flops=4 * Mp * Cpad, transcendentals=0,
            bytes_accessed=(2 + (residual is not None)) * Mp * Cpad * 4),
    )(*inputs)

    return out[:M, :C]


# --------------------------------------------------------------------------
# Host-side glue (NHWC end-to-end between the single entry/exit transposes)
# --------------------------------------------------------------------------
def im2col_nhwc(x_nhwc, ksize, stride, pad):
    """(N,H,W,C) -> patches (N*Ho*Wo, ksize*ksize*C), K-order = (kh, kw, c)."""
    # TODO(synk): fold the 9 conv taps into the kernel as offset GEMMs over the
    # NHWC activation to avoid this ~9x patches materialization in HBM.
    N, H, W, C = x_nhwc.shape
    xp = jnp.pad(x_nhwc, ((0, 0), (pad, pad), (pad, pad), (0, 0)))
    Ho = (H + 2 * pad - ksize) // stride + 1
    Wo = (W + 2 * pad - ksize) // stride + 1
    taps = []
    for kh in range(ksize):
        for kw in range(ksize):
            taps.append(
                xp[:, kh:kh + stride * Ho:stride, kw:kw + stride * Wo:stride, :])
    cols = jnp.stack(taps, axis=3)                      # (N, Ho, Wo, K*K, C)
    return cols.reshape(N * Ho * Wo, ksize * ksize * C), Ho, Wo


def _oihw_to_gemm(w):
    """OIHW (Cout,Cin,kh,kw) -> (kh*kw*Cin, Cout), matching im2col_nhwc order."""
    cout = w.shape[0]
    return jnp.transpose(w, (2, 3, 1, 0)).reshape(-1, cout)


def residual_block_forward(x, params, in_channels, out_channels, stride):
    """x: (N, Cin, H, W) float32 NCHW.  Returns (N, Cout, Ho, Wo)."""
    N, Cin, H, W = x.shape
    x_nhwc = jnp.transpose(x, (0, 2, 3, 1))   # single NCHW->NHWC at entry

    # --- conv1 (3x3, stride) + bn1 + LeakyReLU ---
    # (conv biases b1/b2/bsk are omitted: they cancel in training-mode BN)
    p1, Ho, Wo = im2col_nhwc(x_nhwc, 3, stride, 1)
    h = conv_bn_pallas(p1, _oihw_to_gemm(params["w1"]),
                       params["g1"], params["be1"], apply_relu=True)

    # --- skip connection ---
    if stride != 1 or in_channels != out_channels:
        xs = x_nhwc[:, ::stride, ::stride, :].reshape(N * Ho * Wo, Cin)
        identity = conv_bn_pallas(xs, _oihw_to_gemm(params["wsk"]),
                                  params["gsk"], params["besk"],
                                  apply_relu=False)
    else:
        identity = x_nhwc.reshape(N * Ho * Wo, Cin)

    # --- conv2 (3x3, stride 1) + bn2 + residual add + LeakyReLU (fused) ---
    h_nhwc = h.reshape(N, Ho, Wo, out_channels)
    p2, _, _ = im2col_nhwc(h_nhwc, 3, 1, 1)
    out = conv_bn_pallas(p2, _oihw_to_gemm(params["w2"]),
                         params["g2"], params["be2"],
                         residual=identity, apply_relu=True)

    # single NHWC->NCHW at exit
    return jnp.transpose(out.reshape(N, Ho, Wo, out_channels), (0, 3, 1, 2))


# --------------------------------------------------------------------------
# Pure-JAX reference (mirrors PyTorch forward, training-mode BN, with biases)
# --------------------------------------------------------------------------
def _bn_train_ref(y, gamma, beta):
    mean = y.mean(axis=(0, 2, 3), keepdims=True)
    var = jnp.square(y - mean).mean(axis=(0, 2, 3), keepdims=True)
    return ((y - mean) / jnp.sqrt(var + EPS)
            * gamma.reshape(1, -1, 1, 1) + beta.reshape(1, -1, 1, 1))


def _conv_ref(x, w, b, stride, pad):
    y = jax.lax.conv_general_dilated(
        x, w, (stride, stride), [(pad, pad), (pad, pad)],
        dimension_numbers=("NCHW", "OIHW", "NCHW"))
    return y + b.reshape(1, -1, 1, 1)


def residual_block_ref(x, params, in_channels, out_channels, stride):
    if stride != 1 or in_channels != out_channels:
        identity = _bn_train_ref(
            _conv_ref(x, params["wsk"], params["bsk"], stride, 0),
            params["gsk"], params["besk"])
    else:
        identity = x
    out = _bn_train_ref(_conv_ref(x, params["w1"], params["b1"], stride, 1),
                        params["g1"], params["be1"])
    out = jnp.where(out > 0, out, SLOPE * out)
    out = _bn_train_ref(_conv_ref(out, params["w2"], params["b2"], 1, 1),
                        params["g2"], params["be2"])
    out = out + identity
    return jnp.where(out > 0, out, SLOPE * out)


# --------------------------------------------------------------------------
def init_params(key, cin, cout):
    ks = jax.random.split(key, 12)
    f32 = jnp.float32
    return {
        "w1": 0.2 * jax.random.normal(ks[0], (cout, cin, 3, 3), f32),
        "b1": 0.1 * jax.random.normal(ks[1], (cout,), f32),
        "g1": 1.0 + 0.1 * jax.random.normal(ks[2], (cout,), f32),
        "be1": 0.1 * jax.random.normal(ks[3], (cout,), f32),
        "w2": 0.2 * jax.random.normal(ks[4], (cout, cout, 3, 3), f32),
        "b2": 0.1 * jax.random.normal(ks[5], (cout,), f32),
        "g2": 1.0 + 0.1 * jax.random.normal(ks[6], (cout,), f32),
        "be2": 0.1 * jax.random.normal(ks[7], (cout,), f32),
        "wsk": 0.2 * jax.random.normal(ks[8], (cout, cin, 1, 1), f32),
        "bsk": 0.1 * jax.random.normal(ks[9], (cout,), f32),
        "gsk": 1.0 + 0.1 * jax.random.normal(ks[10], (cout,), f32),
        "besk": 0.1 * jax.random.normal(ks[11], (cout,), f32),
    }


if __name__ == "__main__":
    N, Cin, H, W = 2, 4, 16, 16
    Cout, stride = 8, 2  # exercises the conv1x1 + BN skip path

    key = jax.random.PRNGKey(0)
    kx, kp = jax.random.split(key)
    x = jax.random.normal(kx, (N, Cin, H, W), jnp.float32)
    params = init_params(kp, Cin, Cout)

    fwd = jax.jit(functools.partial(residual_block_forward,
                                    in_channels=Cin, out_channels=Cout,
                                    stride=stride))
    out = fwd(x, params)
    jax.block_until_ready(out)

    ref = residual_block_ref(x, params, Cin, Cout, stride)
    assert out.shape == (N, Cout, H // stride, W // stride), out.shape
    # bf16 MXU GEMM with f32 accumulation -> slightly looser tolerance than the
    # pure-f32 reference.
    max_err = float(jnp.max(jnp.abs(out - ref)))
    assert jnp.allclose(out, ref, atol=3e-2, rtol=3e-2), max_err

    print("KERNEL_OK")
</pallas_src>

<mosaic_0001>
module attributes {stable_mosaic.version = 11 : i64} {
  func.func @_gemm_stats_kernel(%arg0: i32, %arg1: memref<128x36xbf16, #tpu.memory_space<vmem>>, %arg2: memref<36x128xbf16, #tpu.memory_space<vmem>>, %arg3: memref<128x128xf32, #tpu.memory_space<vmem>>, %arg4: memref<1x128xf32, #tpu.memory_space<vmem>>, %arg5: memref<1x128xf32, #tpu.memory_space<vmem>>) attributes {dimension_semantics = [#tpu.dimension_semantics<arbitrary>], iteration_bounds = array<i64: 1>, scalar_prefetch = 0 : i64, scratch_operands = 0 : i64, tpu.core_type = #tpu.core_type<tc>, window_params = [{transform_indices = @transform_0, window_bounds = array<i64: 128, 36>}, {pipeline_mode = #tpu.pipeline_mode<synchronous>, transform_indices = @transform_1, window_bounds = array<i64: 36, 128>}, {transform_indices = @transform_2, window_bounds = array<i64: 128, 128>}, {pipeline_mode = #tpu.pipeline_mode<synchronous>, transform_indices = @transform_3, window_bounds = array<i64: 1, 128>}, {pipeline_mode = #tpu.pipeline_mode<synchronous>, transform_indices = @transform_4, window_bounds = array<i64: 1, 128>}]} {
    %c0 = arith.constant 0 : index
    %c0_0 = arith.constant 0 : index
    %0 = vector.load %arg1[%c0, %c0_0] : memref<128x36xbf16, #tpu.memory_space<vmem>>, vector<128x36xbf16>
    %c0_1 = arith.constant 0 : index
    %c0_2 = arith.constant 0 : index
    %1 = vector.load %arg2[%c0_1, %c0_2] : memref<36x128xbf16, #tpu.memory_space<vmem>>, vector<36x128xbf16>
    %cst = arith.constant dense<0.000000e+00> : vector<128x128xf32>
    %2 = tpu.matmul %0, %1, %cst {dimension_numbers = #tpu.dot_dimension_numbers<[1], [0], [0], [1], [0, 0, 1, 1], [], []>} : vector<128x36xbf16>, vector<36x128xbf16>, vector<128x128xf32> -> vector<128x128xf32>
    %c0_3 = arith.constant 0 : index
    %c0_4 = arith.constant 0 : index
    %3 = vector.load %arg3[%c0_3, %c0_4] : memref<128x128xf32, #tpu.memory_space<vmem>>, vector<128x128xf32>
    tpu.vector_store %arg3[%c0_3, %c0_4], %2 {strides = array<i32>} : memref<128x128xf32, #tpu.memory_space<vmem>>, vector<128x128xf32>,
    %c0_i32 = arith.constant 0 : i32
    %4 = arith.cmpi eq, %arg0, %c0_i32 : i32
    %5 = arith.extui %4 : i1 to i32
    %c0_i32_5 = arith.constant 0 : i32
    %6 = arith.cmpi ne, %5, %c0_i32_5 : i32
    scf.if %6 {
      %cst_16 = arith.constant 0.000000e+00 : f32
      %18 = vector.broadcast %cst_16 : f32 to vector<1x128xf32>
      %c0_17 = arith.constant 0 : index
      %c0_18 = arith.constant 0 : index
      %19 = vector.load %arg4[%c0_17, %c0_18] : memref<1x128xf32, #tpu.memory_space<vmem>>, vector<1x128xf32>
      tpu.vector_store %arg4[%c0_17, %c0_18], %18 {strides = array<i32>} : memref<1x128xf32, #tpu.memory_space<vmem>>, vector<1x128xf32>,
      %cst_19 = arith.constant 0.000000e+00 : f32
      %20 = vector.broadcast %cst_19 : f32 to vector<1x128xf32>
      %c0_20 = arith.constant 0 : index
      %c0_21 = arith.constant 0 : index
      %21 = vector.load %arg5[%c0_20, %c0_21] : memref<1x128xf32, #tpu.memory_space<vmem>>, vector<1x128xf32>
      tpu.vector_store %arg5[%c0_20, %c0_21], %20 {strides = array<i32>} : memref<1x128xf32, #tpu.memory_space<vmem>>, vector<1x128xf32>,
    } else {
    }
    %c0_6 = arith.constant 0 : index
    %c0_7 = arith.constant 0 : index
    %7 = vector.load %arg4[%c0_6, %c0_7] : memref<1x128xf32, #tpu.memory_space<vmem>>, vector<1x128xf32>
    %cst_8 = arith.constant dense<0.000000e+00> : vector<128xf32>
    %8 = vector.multi_reduction <add>, %2, %cst_8 [0] : vector<128x128xf32> to vector<128xf32>
    %9 = vector.shape_cast %8 : vector<128xf32> to vector<1x128xf32>
    %10 = arith.addf %7, %9 : vector<1x128xf32>
    %c0_9 = arith.constant 0 : index
    %c0_10 = arith.constant 0 : index
    %11 = vector.load %arg4[%c0_9, %c0_10] : memref<1x128xf32, #tpu.memory_space<vmem>>, vector<1x128xf32>
    tpu.vector_store %arg4[%c0_9, %c0_10], %10 {strides = array<i32>} : memref<1x128xf32, #tpu.memory_space<vmem>>, vector<1x128xf32>,
    %c0_11 = arith.constant 0 : index
    %c0_12 = arith.constant 0 : index
    %12 = vector.load %arg5[%c0_11, %c0_12] : memref<1x128xf32, #tpu.memory_space<vmem>>, vector<1x128xf32>
    %13 = arith.mulf %2, %2 : vector<128x128xf32>
    %cst_13 = arith.constant dense<0.000000e+00> : vector<128xf32>
    %14 = vector.multi_reduction <add>, %13, %cst_13 [0] : vector<128x128xf32> to vector<128xf32>
    %15 = vector.shape_cast %14 : vector<128xf32> to vector<1x128xf32>
    %16 = arith.addf %12, %15 : vector<1x128xf32>
    %c0_14 = arith.constant 0 : index
    %c0_15 = arith.constant 0 : index
    %17 = vector.load %arg5[%c0_14, %c0_15] : memref<1x128xf32, #tpu.memory_space<vmem>>, vector<1x128xf32>
    tpu.vector_store %arg5[%c0_14, %c0_15], %16 {strides = array<i32>} : memref<1x128xf32, #tpu.memory_space<vmem>>, vector<1x128xf32>,
    return
  }
  func.func @transform_0(%arg0: i32) -> (i32, i32) {
    %c0_i32 = arith.constant 0 : i32
    %c0_i32_0 = arith.constant 0 : i32
    return %arg0, %c0_i32 : i32, i32
  }
  func.func @transform_1(%arg0: i32) -> (i32, i32) {
    %c0_i32 = arith.constant 0 : i32
    %c0_i32_0 = arith.constant 0 : i32
    %c0_i32_1 = arith.constant 0 : i32
    return %c0_i32, %c0_i32_0 : i32, i32
  }
  func.func @transform_2(%arg0: i32) -> (i32, i32) {
    %c0_i32 = arith.constant 0 : i32
    %c0_i32_0 = arith.constant 0 : i32
    return %arg0, %c0_i32 : i32, i32
  }
  func.func @transform_3(%arg0: i32) -> (i32, i32) {
    %c0_i32 = arith.constant 0 : i32
    %c0_i32_0 = arith.constant 0 : i32
    %c0_i32_1 = arith.constant 0 : i32
    return %c0_i32, %c0_i32_0 : i32, i32
  }
  func.func @transform_4(%arg0: i32) -> (i32, i32) {
    %c0_i32 = arith.constant 0 : i32
    %c0_i32_0 = arith.constant 0 : i32
    %c0_i32_1 = arith.constant 0 : i32
    return %c0_i32, %c0_i32_0 : i32, i32
  }
}

module attributes {stable_mosaic.version = 11 : i64} {
  func.func @kernel(%arg0: i32, %arg1: memref<128x128xf32, #tpu.memory_space<vmem>>, %arg2: memref<8x128xf32, #tpu.memory_space<vmem>>, %arg3: memref<128x128xf32, #tpu.memory_space<vmem>>) attributes {dimension_semantics = [#tpu.dimension_semantics<parallel>], iteration_bounds = array<i64: 1>, scalar_prefetch = 0 : i64, scratch_operands = 0 : i64, tpu.core_type = #tpu.core_type<tc>, window_params = [{transform_indices = @transform_0, window_bounds = array<i64: 128, 128>}, {pipeline_mode = #tpu.pipeline_mode<synchronous>, transform_indices = @transform_1, window_bounds = array<i64: 8, 128>}, {transform_indices = @transform_2, window_bounds = array<i64: 128, 128>}]} {
    %c0 = arith.constant 0 : index
    %c0_0 = arith.constant 0 : index
    %0 = vector.load %arg2[%c0, %c0_0] : memref<8x128xf32, #tpu.memory_space<vmem>>, vector<1x128xf32>
    %c1 = arith.constant 1 : index
    %c0_1 = arith.constant 0 : index
    %1 = vector.load %arg2[%c1, %c0_1] : memref<8x128xf32, #tpu.memory_space<vmem>>, vector<1x128xf32>
    %c0_2 = arith.constant 0 : index
    %c0_3 = arith.constant 0 : index
    %2 = vector.load %arg1[%c0_2, %c0_3] : memref<128x128xf32, #tpu.memory_space<vmem>>, vector<128x128xf32>
    %3 = vector.broadcast %0 : vector<1x128xf32> to vector<128x128xf32>
    %4 = arith.mulf %2, %3 : vector<128x128xf32>
    %5 = vector.broadcast %1 : vector<1x128xf32> to vector<128x128xf32>
    %6 = arith.addf %4, %5 : vector<128x128xf32>
    %cst = arith.constant 1.000000e-01 : f32
    %7 = vector.broadcast %cst : f32 to vector<128x128xf32>
    %8 = arith.mulf %7, %6 : vector<128x128xf32>
    %9 = arith.maximumf %6, %8 : vector<128x128xf32>
    %c0_4 = arith.constant 0 : index
    %c0_5 = arith.constant 0 : index
    %10 = vector.load %arg3[%c0_4, %c0_5] : memref<128x128xf32, #tpu.memory_space<vmem>>, vector<128x128xf32>
    tpu.vector_store %arg3[%c0_4, %c0_5], %9 {strides = array<i32>} : memref<128x128xf32, #tpu.memory_space<vmem>>, vector<128x128xf32>,
    return
  }
  func.func @transform_0(%arg0: i32) -> (i32, i32) {
    %c0_i32 = arith.constant 0 : i32
    %c0_i32_0 = arith.constant 0 : i32
    return %arg0, %c0_i32 : i32, i32
  }
  func.func @transform_1(%arg0: i32) -> (i32, i32) {
    %c0_i32 = arith.constant 0 : i32
    %c0_i32_0 = arith.constant 0 : i32
    %c0_i32_1 = arith.constant 0 : i32
    return %c0_i32, %c0_i32_0 : i32, i32
  }
  func.func @transform_2(%arg0: i32) -> (i32, i32) {
    %c0_i32 = arith.constant 0 : i32
    %c0_i32_0 = arith.constant 0 : i32
    return %arg0, %c0_i32 : i32, i32
  }
}

module attributes {stable_mosaic.version = 11 : i64} {
  func.func @_gemm_stats_kernel(%arg0: i32, %arg1: memref<128x72xbf16, #tpu.memory_space<vmem>>, %arg2: memref<72x128xbf16, #tpu.memory_space<vmem>>, %arg3: memref<128x128xf32, #tpu.memory_space<vmem>>, %arg4: memref<1x128xf32, #tpu.memory_space<vmem>>, %arg5: memref<1x128xf32, #tpu.memory_space<vmem>>) attributes {dimension_semantics = [#tpu.dimension_semantics<arbitrary>], iteration_bounds = array<i64: 1>, scalar_prefetch = 0 : i64, scratch_operands = 0 : i64, tpu.core_type = #tpu.core_type<tc>, window_params = [{transform_indices = @transform_0, window_bounds = array<i64: 128, 72>}, {pipeline_mode = #tpu.pipeline_mode<synchronous>, transform_indices = @transform_1, window_bounds = array<i64: 72, 128>}, {transform_indices = @transform_2, window_bounds = array<i64: 128, 128>}, {pipeline_mode = #tpu.pipeline_mode<synchronous>, transform_indices = @transform_3, window_bounds = array<i64: 1, 128>}, {pipeline_mode = #tpu.pipeline_mode<synchronous>, transform_indices = @transform_4, window_bounds = array<i64: 1, 128>}]} {
    %c0 = arith.constant 0 : index
    %c0_0 = arith.constant 0 : index
    %0 = vector.load %arg1[%c0, %c0_0] : memref<128x72xbf16, #tpu.memory_space<vmem>>, vector<128x72xbf16>
    %c0_1 = arith.constant 0 : index
    %c0_2 = arith.constant 0 : index
    %1 = vector.load %arg2[%c0_1, %c0_2] : memref<72x128xbf16, #tpu.memory_space<vmem>>, vector<72x128xbf16>
    %cst = arith.constant dense<0.000000e+00> : vector<128x128xf32>
    %2 = tpu.matmul %0, %1, %cst {dimension_numbers = #tpu.dot_dimension_numbers<[1], [0], [0], [1], [0, 0, 1, 1], [], []>} : vector<128x72xbf16>, vector<72x128xbf16>, vector<128x128xf32> -> vector<128x128xf32>
    %c0_3 = arith.constant 0 : index
    %c0_4 = arith.constant 0 : index
    %3 = vector.load %arg3[%c0_3, %c0_4] : memref<128x128xf32, #tpu.memory_space<vmem>>, vector<128x128xf32>
    tpu.vector_store %arg3[%c0_3, %c0_4], %2 {strides = array<i32>} : memref<128x128xf32, #tpu.memory_space<vmem>>, vector<128x128xf32>,
    %c0_i32 = arith.constant 0 : i32
    %4 = arith.cmpi eq, %arg0, %c0_i32 : i32
    %5 = arith.extui %4 : i1 to i32
    %c0_i32_5 = arith.constant 0 : i32
    %6 = arith.cmpi ne, %5, %c0_i32_5 : i32
    scf.if %6 {
      %cst_16 = arith.constant 0.000000e+00 : f32
      %18 = vector.broadcast %cst_16 : f32 to vector<1x128xf32>
      %c0_17 = arith.constant 0 : index
      %c0_18 = arith.constant 0 : index
      %19 = vector.load %arg4[%c0_17, %c0_18] : memref<1x128xf32, #tpu.memory_space<vmem>>, vector<1x128xf32>
      tpu.vector_store %arg4[%c0_17, %c0_18], %18 {strides = array<i32>} : memref<1x128xf32, #tpu.memory_space<vmem>>, vector<1x128xf32>,
      %cst_19 = arith.constant 0.000000e+00 : f32
      %20 = vector.broadcast %cst_19 : f32 to vector<1x128xf32>
      %c0_20 = arith.constant 0 : index
      %c0_21 = arith.constant 0 : index
      %21 = vector.load %arg5[%c0_20, %c0_21] : memref<1x128xf32, #tpu.memory_space<vmem>>, vector<1x128xf32>
      tpu.vector_store %arg5[%c0_20, %c0_21], %20 {strides = array<i32>} : memref<1x128xf32, #tpu.memory_space<vmem>>, vector<1x128xf32>,
    } else {
    }
    %c0_6 = arith.constant 0 : index
    %c0_7 = arith.constant 0 : index
    %7 = vector.load %arg4[%c0_6, %c0_7] : memref<1x128xf32, #tpu.memory_space<vmem>>, vector<1x128xf32>
    %cst_8 = arith.constant dense<0.000000e+00> : vector<128xf32>
    %8 = vector.multi_reduction <add>, %2, %cst_8 [0] : vector<128x128xf32> to vector<128xf32>
    %9 = vector.shape_cast %8 : vector<128xf32> to vector<1x128xf32>
    %10 = arith.addf %7, %9 : vector<1x128xf32>
    %c0_9 = arith.constant 0 : index
    %c0_10 = arith.constant 0 : index
    %11 = vector.load %arg4[%c0_9, %c0_10] : memref<1x128xf32, #tpu.memory_space<vmem>>, vector<1x128xf32>
    tpu.vector_store %arg4[%c0_9, %c0_10], %10 {strides = array<i32>} : memref<1x128xf32, #tpu.memory_space<vmem>>, vector<1x128xf32>,
    %c0_11 = arith.constant 0 : index
    %c0_12 = arith.constant 0 : index
    %12 = vector.load %arg5[%c0_11, %c0_12] : memref<1x128xf32, #tpu.memory_space<vmem>>, vector<1x128xf32>
    %13 = arith.mulf %2, %2 : vector<128x128xf32>
    %cst_13 = arith.constant dense<0.000000e+00> : vector<128xf32>
    %14 = vector.multi_reduction <add>, %13, %cst_13 [0] : vector<128x128xf32> to vector<128xf32>
    %15 = vector.shape_cast %14 : vector<128xf32> to vector<1x128xf32>
    %16 = arith.addf %12, %15 : vector<1x128xf32>
    %c0_14 = arith.constant 0 : index
    %c0_15 = arith.constant 0 : index
    %17 = vector.load %arg5[%c0_14, %c0_15] : memref<1x128xf32, #tpu.memory_space<vmem>>, vector<1x128xf32>
    tpu.vector_store %arg5[%c0_14, %c0_15], %16 {strides = array<i32>} : memref<1x128xf32, #tpu.memory_space<vmem>>, vector<1x128xf32>,
    return
  }
  func.func @transform_0(%arg0: i32) -> (i32, i32) {
    %c0_i32 = arith.constant 0 : i32
    %c0_i32_0 = arith.constant 0 : i32
    return %arg0, %c0_i32 : i32, i32
  }
  func.func @transform_1(%arg0: i32) -> (i32, i32) {
    %c0_i32 = arith.constant 0 : i32
    %c0_i32_0 = arith.constant 0 : i32
    %c0_i32_1 = arith.constant 0 : i32
    return %c0_i32, %c0_i32_0 : i32, i32
  }
  func.func @transform_2(%arg0: i32) -> (i32, i32) {
    %c0_i32 = arith.constant 0 : i32
    %c0_i32_0 = arith.constant 0 : i32
    return %arg0, %c0_i32 : i32, i32
  }
  func.func @transform_3(%arg0: i32) -> (i32, i32) {
    %c0_i32 = arith.constant 0 : i32
    %c0_i32_0 = arith.constant 0 : i32
    %c0_i32_1 = arith.constant 0 : i32
    return %c0_i32, %c0_i32_0 : i32, i32
  }
  func.func @transform_4(%arg0: i32) -> (i32, i32) {
    %c0_i32 = arith.constant 0 : i32
    %c0_i32_0 = arith.constant 0 : i32
    %c0_i32_1 = arith.constant 0 : i32
    return %c0_i32, %c0_i32_0 : i32, i32
  }
}

module attributes {stable_mosaic.version = 11 : i64} {
  func.func @_gemm_stats_kernel(%arg0: i32, %arg1: memref<128x4xbf16, #tpu.memory_space<vmem>>, %arg2: memref<4x128xbf16, #tpu.memory_space<vmem>>, %arg3: memref<128x128xf32, #tpu.memory_space<vmem>>, %arg4: memref<1x128xf32, #tpu.memory_space<vmem>>, %arg5: memref<1x128xf32, #tpu.memory_space<vmem>>) attributes {dimension_semantics = [#tpu.dimension_semantics<arbitrary>], iteration_bounds = array<i64: 1>, scalar_prefetch = 0 : i64, scratch_operands = 0 : i64, tpu.core_type = #tpu.core_type<tc>, window_params = [{transform_indices = @transform_0, window_bounds = array<i64: 128, 4>}, {pipeline_mode = #tpu.pipeline_mode<synchronous>, transform_indices = @transform_1, window_bounds = array<i64: 4, 128>}, {transform_indices = @transform_2, window_bounds = array<i64: 128, 128>}, {pipeline_mode = #tpu.pipeline_mode<synchronous>, transform_indices = @transform_3, window_bounds = array<i64: 1, 128>}, {pipeline_mode = #tpu.pipeline_mode<synchronous>, transform_indices = @transform_4, window_bounds = array<i64: 1, 128>}]} {
    %c0 = arith.constant 0 : index
    %c0_0 = arith.constant 0 : index
    %0 = vector.load %arg1[%c0, %c0_0] : memref<128x4xbf16, #tpu.memory_space<vmem>>, vector<128x4xbf16>
    %c0_1 = arith.constant 0 : index
    %c0_2 = arith.constant 0 : index
    %1 = vector.load %arg2[%c0_1, %c0_2] : memref<4x128xbf16, #tpu.memory_space<vmem>>, vector<4x128xbf16>
    %cst = arith.constant dense<0.000000e+00> : vector<128x128xf32>
    %2 = tpu.matmul %0, %1, %cst {dimension_numbers = #tpu.dot_dimension_numbers<[1], [0], [0], [1], [0, 0, 1, 1], [], []>} : vector<128x4xbf16>, vector<4x128xbf16>, vector<128x128xf32> -> vector<128x128xf32>
    %c0_3 = arith.constant 0 : index
    %c0_4 = arith.constant 0 : index
    %3 = vector.load %arg3[%c0_3, %c0_4] : memref<128x128xf32, #tpu.memory_space<vmem>>, vector<128x128xf32>
    tpu.vector_store %arg3[%c0_3, %c0_4], %2 {strides = array<i32>} : memref<128x128xf32, #tpu.memory_space<vmem>>, vector<128x128xf32>,
    %c0_i32 = arith.constant 0 : i32
    %4 = arith.cmpi eq, %arg0, %c0_i32 : i32
    %5 = arith.extui %4 : i1 to i32
    %c0_i32_5 = arith.constant 0 : i32
    %6 = arith.cmpi ne, %5, %c0_i32_5 : i32
    scf.if %6 {
      %cst_16 = arith.constant 0.000000e+00 : f32
      %18 = vector.broadcast %cst_16 : f32 to vector<1x128xf32>
      %c0_17 = arith.constant 0 : index
      %c0_18 = arith.constant 0 : index
      %19 = vector.load %arg4[%c0_17, %c0_18] : memref<1x128xf32, #tpu.memory_space<vmem>>, vector<1x128xf32>
      tpu.vector_store %arg4[%c0_17, %c0_18], %18 {strides = array<i32>} : memref<1x128xf32, #tpu.memory_space<vmem>>, vector<1x128xf32>,
      %cst_19 = arith.constant 0.000000e+00 : f32
      %20 = vector.broadcast %cst_19 : f32 to vector<1x128xf32>
      %c0_20 = arith.constant 0 : index
      %c0_21 = arith.constant 0 : index
      %21 = vector.load %arg5[%c0_20, %c0_21] : memref<1x128xf32, #tpu.memory_space<vmem>>, vector<1x128xf32>
      tpu.vector_store %arg5[%c0_20, %c0_21], %20 {strides = array<i32>} : memref<1x128xf32, #tpu.memory_space<vmem>>, vector<1x128xf32>,
    } else {
    }
    %c0_6 = arith.constant 0 : index
    %c0_7 = arith.constant 0 : index
    %7 = vector.load %arg4[%c0_6, %c0_7] : memref<1x128xf32, #tpu.memory_space<vmem>>, vector<1x128xf32>
    %cst_8 = arith.constant dense<0.000000e+00> : vector<128xf32>
    %8 = vector.multi_reduction <add>, %2, %cst_8 [0] : vector<128x128xf32> to vector<128xf32>
    %9 = vector.shape_cast %8 : vector<128xf32> to vector<1x128xf32>
    %10 = arith.addf %7, %9 : vector<1x128xf32>
    %c0_9 = arith.constant 0 : index
    %c0_10 = arith.constant 0 : index
    %11 = vector.load %arg4[%c0_9, %c0_10] : memref<1x128xf32, #tpu.memory_space<vmem>>, vector<1x128xf32>
    tpu.vector_store %arg4[%c0_9, %c0_10], %10 {strides = array<i32>} : memref<1x128xf32, #tpu.memory_space<vmem>>, vector<1x128xf32>,
    %c0_11 = arith.constant 0 : index
    %c0_12 = arith.constant 0 : index
    %12 = vector.load %arg5[%c0_11, %c0_12] : memref<1x128xf32, #tpu.memory_space<vmem>>, vector<1x128xf32>
    %13 = arith.mulf %2, %2 : vector<128x128xf32>
    %cst_13 = arith.constant dense<0.000000e+00> : vector<128xf32>
    %14 = vector.multi_reduction <add>, %13, %cst_13 [0] : vector<128x128xf32> to vector<128xf32>
    %15 = vector.shape_cast %14 : vector<128xf32> to vector<1x128xf32>
    %16 = arith.addf %12, %15 : vector<1x128xf32>
    %c0_14 = arith.constant 0 : index
    %c0_15 = arith.constant 0 : index
    %17 = vector.load %arg5[%c0_14, %c0_15] : memref<1x128xf32, #tpu.memory_space<vmem>>, vector<1x128xf32>
    tpu.vector_store %arg5[%c0_14, %c0_15], %16 {strides = array<i32>} : memref<1x128xf32, #tpu.memory_space<vmem>>, vector<1x128xf32>,
    return
  }
  func.func @transform_0(%arg0: i32) -> (i32, i32) {
    %c0_i32 = arith.constant 0 : i32
    %c0_i32_0 = arith.constant 0 : i32
    return %arg0, %c0_i32 : i32, i32
  }
  func.func @transform_1(%arg0: i32) -> (i32, i32) {
    %c0_i32 = arith.constant 0 : i32
    %c0_i32_0 = arith.constant 0 : i32
    %c0_i32_1 = arith.constant 0 : i32
    return %c0_i32, %c0_i32_0 : i32, i32
  }
  func.func @transform_2(%arg0: i32) -> (i32, i32) {
    %c0_i32 = arith.constant 0 : i32
    %c0_i32_0 = arith.constant 0 : i32
    return %arg0, %c0_i32 : i32, i32
  }
  func.func @transform_3(%arg0: i32) -> (i32, i32) {
    %c0_i32 = arith.constant 0 : i32
    %c0_i32_0 = arith.constant 0 : i32
    %c0_i32_1 = arith.constant 0 : i32
    return %c0_i32, %c0_i32_0 : i32, i32
  }
  func.func @transform_4(%arg0: i32) -> (i32, i32) {
    %c0_i32 = arith.constant 0 : i32
    %c0_i32_0 = arith.constant 0 : i32
    %c0_i32_1 = arith.constant 0 : i32
    return %c0_i32, %c0_i32_0 : i32, i32
  }
}

module attributes {stable_mosaic.version = 11 : i64} {
  func.func @kernel(%arg0: i32, %arg1: memref<128x128xf32, #tpu.memory_space<vmem>>, %arg2: memref<8x128xf32, #tpu.memory_space<vmem>>, %arg3: memref<128x128xf32, #tpu.memory_space<vmem>>) attributes {dimension_semantics = [#tpu.dimension_semantics<parallel>], iteration_bounds = array<i64: 1>, scalar_prefetch = 0 : i64, scratch_operands = 0 : i64, tpu.core_type = #tpu.core_type<tc>, window_params = [{transform_indices = @transform_0, window_bounds = array<i64: 128, 128>}, {pipeline_mode = #tpu.pipeline_mode<synchronous>, transform_indices = @transform_1, window_bounds = array<i64: 8, 128>}, {transform_indices = @transform_2, window_bounds = array<i64: 128, 128>}]} {
    %c0 = arith.constant 0 : index
    %c0_0 = arith.constant 0 : index
    %0 = vector.load %arg2[%c0, %c0_0] : memref<8x128xf32, #tpu.memory_space<vmem>>, vector<1x128xf32>
    %c1 = arith.constant 1 : index
    %c0_1 = arith.constant 0 : index
    %1 = vector.load %arg2[%c1, %c0_1] : memref<8x128xf32, #tpu.memory_space<vmem>>, vector<1x128xf32>
    %c0_2 = arith.constant 0 : index
    %c0_3 = arith.constant 0 : index
    %2 = vector.load %arg1[%c0_2, %c0_3] : memref<128x128xf32, #tpu.memory_space<vmem>>, vector<128x128xf32>
    %3 = vector.broadcast %0 : vector<1x128xf32> to vector<128x128xf32>
    %4 = arith.mulf %2, %3 : vector<128x128xf32>
    %5 = vector.broadcast %1 : vector<1x128xf32> to vector<128x128xf32>
    %6 = arith.addf %4, %5 : vector<128x128xf32>
    %c0_4 = arith.constant 0 : index
    %c0_5 = arith.constant 0 : index
    %7 = vector.load %arg3[%c0_4, %c0_5] : memref<128x128xf32, #tpu.memory_space<vmem>>, vector<128x128xf32>
    tpu.vector_store %arg3[%c0_4, %c0_5], %6 {strides = array<i32>} : memref<128x128xf32, #tpu.memory_space<vmem>>, vector<128x128xf32>,
    return
  }
  func.func @transform_0(%arg0: i32) -> (i32, i32) {
    %c0_i32 = arith.constant 0 : i32
    %c0_i32_0 = arith.constant 0 : i32
    return %arg0, %c0_i32 : i32, i32
  }
  func.func @transform_1(%arg0: i32) -> (i32, i32) {
    %c0_i32 = arith.constant 0 : i32
    %c0_i32_0 = arith.constant 0 : i32
    %c0_i32_1 = arith.constant 0 : i32
    return %c0_i32, %c0_i32_0 : i32, i32
  }
  func.func @transform_2(%arg0: i32) -> (i32, i32) {
    %c0_i32 = arith.constant 0 : i32
    %c0_i32_0 = arith.constant 0 : i32
    return %arg0, %c0_i32 : i32, i32
  }
}

module attributes {stable_mosaic.version = 11 : i64} {
  func.func @kernel(%arg0: i32, %arg1: memref<128x128xf32, #tpu.memory_space<vmem>>, %arg2: memref<8x128xf32, #tpu.memory_space<vmem>>, %arg3: memref<128x128xf32, #tpu.memory_space<vmem>>, %arg4: memref<128x128xf32, #tpu.memory_space<vmem>>) attributes {dimension_semantics = [#tpu.dimension_semantics<parallel>], iteration_bounds = array<i64: 1>, scalar_prefetch = 0 : i64, scratch_operands = 0 : i64, tpu.core_type = #tpu.core_type<tc>, window_params = [{transform_indices = @transform_0, window_bounds = array<i64: 128, 128>}, {pipeline_mode = #tpu.pipeline_mode<synchronous>, transform_indices = @transform_1, window_bounds = array<i64: 8, 128>}, {transform_indices = @transform_2, window_bounds = array<i64: 128, 128>}, {transform_indices = @transform_3, window_bounds = array<i64: 128, 128>}]} {
    %c0 = arith.constant 0 : index
    %c0_0 = arith.constant 0 : index
    %0 = vector.load %arg2[%c0, %c0_0] : memref<8x128xf32, #tpu.memory_space<vmem>>, vector<1x128xf32>
    %c1 = arith.constant 1 : index
    %c0_1 = arith.constant 0 : index
    %1 = vector.load %arg2[%c1, %c0_1] : memref<8x128xf32, #tpu.memory_space<vmem>>, vector<1x128xf32>
    %c0_2 = arith.constant 0 : index
    %c0_3 = arith.constant 0 : index
    %2 = vector.load %arg1[%c0_2, %c0_3] : memref<128x128xf32, #tpu.memory_space<vmem>>, vector<128x128xf32>
    %3 = vector.broadcast %0 : vector<1x128xf32> to vector<128x128xf32>
    %4 = arith.mulf %2, %3 : vector<128x128xf32>
    %5 = vector.broadcast %1 : vector<1x128xf32> to vector<128x128xf32>
    %6 = arith.addf %4, %5 : vector<128x128xf32>
    %c0_4 = arith.constant 0 : index
    %c0_5 = arith.constant 0 : index
    %7 = vector.load %arg3[%c0_4, %c0_5] : memref<128x128xf32, #tpu.memory_space<vmem>>, vector<128x128xf32>
    %8 = arith.addf %6, %7 : vector<128x128xf32>
    %cst = arith.constant 1.000000e-01 : f32
    %9 = vector.broadcast %cst : f32 to vector<128x128xf32>
    %10 = arith.mulf %9, %8 : vector<128x128xf32>
    %11 = arith.maximumf %8, %10 : vector<128x128xf32>
    %c0_6 = arith.constant 0 : index
    %c0_7 = arith.constant 0 : index
    %12 = vector.load %arg4[%c0_6, %c0_7] : memref<128x128xf32, #tpu.memory_space<vmem>>, vector<128x128xf32>
    tpu.vector_store %arg4[%c0_6, %c0_7], %11 {strides = array<i32>} : memref<128x128xf32, #tpu.memory_space<vmem>>, vector<128x128xf32>,
    return
  }
  func.func @transform_0(%arg0: i32) -> (i32, i32) {
    %c0_i32 = arith.constant 0 : i32
    %c0_i32_0 = arith.constant 0 : i32
    return %arg0, %c0_i32 : i32, i32
  }
  func.func @transform_1(%arg0: i32) -> (i32, i32) {
    %c0_i32 = arith.constant 0 : i32
    %c0_i32_0 = arith.constant 0 : i32
    %c0_i32_1 = arith.constant 0 : i32
    return %c0_i32, %c0_i32_0 : i32, i32
  }
  func.func @transform_2(%arg0: i32) -> (i32, i32) {
    %c0_i32 = arith.constant 0 : i32
    %c0_i32_0 = arith.constant 0 : i32
    return %arg0, %c0_i32 : i32, i32
  }
  func.func @transform_3(%arg0: i32) -> (i32, i32) {
    %c0_i32 = arith.constant 0 : i32
    %c0_i32_0 = arith.constant 0 : i32
    return %arg0, %c0_i32 : i32, i32
  }
}

</mosaic_0001>

<llo_original>
// kernel: residual_block_forward.7
$region0: #{residual_block_forward.7}
  #allocation0 [shape = 'u32[]', space=smem, size = 0x4, offset = 0x4, fixed_abs, tag = 'smem constant byte address 0x4 - core index']
  #allocation1 [shape = 'u32[144,128]{1,0:T(1,128)}', space=vmem, size = 0x12000, scoped, tag = 'internal scratch']
  %s0 = inlined_call_operand.hbm [shape: f32[128,128], index: 0, kind: input, shape index: {}]
  %s1 = inlined_call_operand.hbm [shape: f32[8,128], index: 1, kind: input, shape index: {}]
  %s2 = inlined_call_operand.hbm [shape: f32[128,128], index: 2, kind: output, shape index: {}]
  %s3 = sld [smem:[#allocation0]]
  $region26: #{residual_block_forward.7} parent=0
    _
  %s5 = ssub.s32 1, %s3
  %s6 = scalar_select 0, %s5, %s3
  $region1: #{residual_block_forward.7} parent=0
    #allocation2 [shape = 'u8[65536]{0}', space=vmem, size = 0x10000, scoped, tag = 'input window, operand 0, single buffered']
    #allocation3 [shape = 's32[1]{0}', space=sflag, size = 0x4, scoped, tag = 'scoped memory for residual_block_forward.7']
    #allocation4 [shape = 's32[1]{0}', space=sflag, size = 0x4, scoped, tag = 'scoped memory for residual_block_forward.7']
    #allocation5 [shape = 'u8[4096]{0}', space=vmem, size = 0x1000, scoped, tag = 'input window, operand 1, single buffered']
    #allocation6 [shape = 's32[1]{0}', space=sflag, size = 0x4, scoped, tag = 'scoped memory for residual_block_forward.7']
    #allocation7 [shape = 'u8[65536]{0}', space=vmem, size = 0x10000, scoped, tag = 'output window, operand 0, single buffered']
    %7 = vsyncpa [#allocation3], 0
    %8 = vsyncpa [#allocation6], 0
    %9 = vsyncpa [#allocation4], 0
    // Predicated region
    $region2: #{residual_block_forward.7} parent=1 // pred_check
      _
    $region3: #{residual_block_forward.7} parent=1 // pred_check_branch
      %11 = sbr.rel (0) target = $region5
    $region4: #{residual_block_forward.7} parent=1 // pred_region
      %s13 = ssub.s32 2048, 2048
      %14 = vsyncadd [#allocation3], %s13
      %s15 = sshll.u32 [#allocation2], 4
      %s16 = int_to_ptr.vmem [resolvable:$true] %s15
      %21 = dma.hbm_to_vmem [thread:$0]  %s0, 2048, %s16, [#allocation3], 128, 128, 8
    $region5: #{residual_block_forward.7} parent=1 // pred_fallthru
      _
    // Predicated region
    $region6: #{residual_block_forward.7} parent=1 // pred_check
      _
    $region7: #{residual_block_forward.7} parent=1 // pred_check_branch
      %23 = sbr.rel (0) target = $region9
    $region8: #{residual_block_forward.7} parent=1 // pred_region
      %s25 = ssub.s32 128, 128
      %26 = vsyncadd [#allocation6], %s25
      %s28 = sshll.u32 [#allocation5], 4
      %s29 = int_to_ptr.vmem [resolvable:$true] %s28
      %31 = dma.hbm_to_vmem [thread:$0]  %s1, 128, %s29, [#allocation6]
    $region9: #{residual_block_forward.7} parent=1 // pred_fallthru
      _
    // Predicated region
    $region10: #{residual_block_forward.7} parent=1 // pred_check
      _
    $region11: #{residual_block_forward.7} parent=1 // pred_check_branch
      %33 = sbr.rel (0) target = $region13
    $region12: #{residual_block_forward.7} parent=1 // pred_region
      %34 = dma.done [#allocation3], 2048
    $region13: #{residual_block_forward.7} parent=1 // pred_fallthru
      _
    // Predicated region
    $region14: #{residual_block_forward.7} parent=1 // pred_check
      _
    $region15: #{residual_block_forward.7} parent=1 // pred_check_branch
      %36 = sbr.rel (0) target = $region17
    $region16: #{residual_block_forward.7} parent=1 // pred_region
      %37 = dma.done [#allocation6], 128
    $region17: #{residual_block_forward.7} parent=1 // pred_fallthru
      _
    %v38 = vld [vmem:[#allocation5] sm:$0x1]
    %v39 = vld [vmem:[#allocation5 + $0x1] sm:$0x1]
    %v40 = vld [vmem:[#allocation2] sm:$0xff]
    %v41 = vld [vmem:[#allocation2 + $0x8] sm:$0xff]
    %v42 = vld [vmem:[#allocation2 + $0x10] sm:$0xff]
    %v43 = vld [vmem:[#allocation2 + $0x18] sm:$0xff]
    %v44 = vld [vmem:[#allocation2 + $0x20] sm:$0xff]
    %v45 = vld [vmem:[#allocation2 + $0x28] sm:$0xff]
    %v46 = vld [vmem:[#allocation2 + $0x30] sm:$0xff]
    %v47 = vld [vmem:[#allocation2 + $0x38] sm:$0xff]
    %v48 = vld [vmem:[#allocation2 + $0x40] sm:$0xff]
    %v49 = vld [vmem:[#allocation2 + $0x48] sm:$0xff]
    %v50 = vld [vmem:[#allocation2 + $0x50] sm:$0xff]
    %v51 = vld [vmem:[#allocation2 + $0x58] sm:$0xff]
    %v52 = vld [vmem:[#allocation2 + $0x60] sm:$0xff]
    %v53 = vld [vmem:[#allocation2 + $0x68] sm:$0xff]
    %v54 = vld [vmem:[#allocation2 + $0x70] sm:$0xff]
    %v55 = vld [vmem:[#allocation2 + $0x78] sm:$0xff]
    %v56 = vlaneseq
    %v57 = vshrl.u32 %v56, 7
    %v58 = vsub.s32 0, %v57
    %v59 = vrot.slane %v38, %v58
    %v60 = vmul.f32 %v40, %v59
    %v61 = vmul.f32 %v41, %v59
    %v62 = vmul.f32 %v42, %v59
    %v63 = vmul.f32 %v43, %v59
    %v64 = vmul.f32 %v44, %v59
    %v65 = vmul.f32 %v45, %v59
    %v66 = vmul.f32 %v46, %v59
    %v67 = vmul.f32 %v47, %v59
    %v68 = vmul.f32 %v48, %v59
    %v69 = vmul.f32 %v49, %v59
    %v70 = vmul.f32 %v50, %v59
    %v71 = vmul.f32 %v51, %v59
    %v72 = vmul.f32 %v52, %v59
    %v73 = vmul.f32 %v53, %v59
    %v74 = vmul.f32 %v54, %v59
    %v75 = vmul.f32 %v55, %v59
    %v76 = vlaneseq
    %v77 = vshrl.u32 %v76, 7
    %v78 = vsub.s32 0, %v77
    %v79 = vrot.slane %v39, %v78
    %v80 = vadd.f32 %v60, %v79
    %v81 = vadd.f32 %v61, %v79
    %v82 = vadd.f32 %v62, %v79
    %v83 = vadd.f32 %v63, %v79
    %v84 = vadd.f32 %v64, %v79
    %v85 = vadd.f32 %v65, %v79
    %v86 = vadd.f32 %v66, %v79
    %v87 = vadd.f32 %v67, %v79
    %v88 = vadd.f32 %v68, %v79
    %v89 = vadd.f32 %v69, %v79
    %v90 = vadd.f32 %v70, %v79
    %v91 = vadd.f32 %v71, %v79
    %v92 = vadd.f32 %v72, %v79
    %v93 = vadd.f32 %v73, %v79
    %v94 = vadd.f32 %v74, %v79
    %v95 = vadd.f32 %v75, %v79
    %v96 = vmul.f32 %v80, 0.1
    %v97 = vmul.f32 %v81, 0.1
    %v98 = vmul.f32 %v82, 0.1
    %v99 = vmul.f32 %v83, 0.1
    %v100 = vmul.f32 %v84, 0.1
    %v101 = vmul.f32 %v85, 0.1
    %v102 = vmul.f32 %v86, 0.1
    %v103 = vmul.f32 %v87, 0.1
    %v104 = vmul.f32 %v88, 0.1
    %v105 = vmul.f32 %v89, 0.1
    %v106 = vmul.f32 %v90, 0.1
    %v107 = vmul.f32 %v91, 0.1
    %v108 = vmul.f32 %v92, 0.1
    %v109 = vmul.f32 %v93, 0.1
    %v110 = vmul.f32 %v94, 0.1
    %v111 = vmul.f32 %v95, 0.1
    %v112 = vmax.f32 %v80, %v96
    %v113 = vmax.f32 %v81, %v97
    %v114 = vmax.f32 %v82, %v98
    %v115 = vmax.f32 %v83, %v99
    %v116 = vmax.f32 %v84, %v100
    %v117 = vmax.f32 %v85, %v101
    %v118 = vmax.f32 %v86, %v102
    %v119 = vmax.f32 %v87, %v103
    %v120 = vmax.f32 %v88, %v104
    %v121 = vmax.f32 %v89, %v105
    %v122 = vmax.f32 %v90, %v106
    %v123 = vmax.f32 %v91, %v107
    %v124 = vmax.f32 %v92, %v108
    %v125 = vmax.f32 %v93, %v109
    %v126 = vmax.f32 %v94, %v110
    %v127 = vmax.f32 %v95, %v111
    %128 = vst [vmem:[#allocation7] sm:$0xff] %v112
    %129 = vst [vmem:[#allocation7 + $0x8] sm:$0xff] %v113
    %130 = vst [vmem:[#allocation7 + $0x10] sm:$0xff] %v114
    %131 = vst [vmem:[#allocation7 + $0x18] sm:$0xff] %v115
    %132 = vst [vmem:[#allocation7 + $0x20] sm:$0xff] %v116
    %133 = vst [vmem:[#allocation7 + $0x28] sm:$0xff] %v117
    %134 = vst [vmem:[#allocation7 + $0x30] sm:$0xff] %v118
    %135 = vst [vmem:[#allocation7 + $0x38] sm:$0xff] %v119
    %136 = vst [vmem:[#allocation7 + $0x40] sm:$0xff] %v120
    %137 = vst [vmem:[#allocation7 + $0x48] sm:$0xff] %v121
    %138 = vst [vmem:[#allocation7 + $0x50] sm:$0xff] %v122
    %139 = vst [vmem:[#allocation7 + $0x58] sm:$0xff] %v123
    %140 = vst [vmem:[#allocation7 + $0x60] sm:$0xff] %v124
    %141 = vst [vmem:[#allocation7 + $0x68] sm:$0xff] %v125
    %142 = vst [vmem:[#allocation7 + $0x70] sm:$0xff] %v126
    %143 = vst [vmem:[#allocation7 + $0x78] sm:$0xff] %v127
    // Predicated region
    $region18: #{residual_block_forward.7} parent=1 // pred_check
      _
    $region19: #{residual_block_forward.7} parent=1 // pred_check_branch
      %145 = sbr.rel (0) target = $region21
    $region20: #{residual_block_forward.7} parent=1 // pred_region
      %s147 = ssub.s32 2048, 2048
      %148 = vsyncadd [#allocation4], %s147
      %s149 = sshll.u32 [#allocation7], 4
      %s150 = int_to_ptr.vmem [resolvable:$true] %s149
      %155 = dma.vmem_to_hbm [thread:$0]  %s150, 2048, %s2, [#allocation4], 128, 128, 8
    $region21: #{residual_block_forward.7} parent=1 // pred_fallthru
      _
    // Predicated region
    $region22: #{residual_block_forward.7} parent=1 // pred_check
      _
    $region23: #{residual_block_forward.7} parent=1 // pred_check_branch
      %157 = sbr.rel (0) target = $region25
    $region24: #{residual_block_forward.7} parent=1 // pred_region
      %158 = dma.done [#allocation4], 2048
    $region25: #{residual_block_forward.7} parent=1 // pred_fallthru
      _
    %159 = vsyncpa [#allocation3], 1
    %160 = vsyncpa [#allocation6], 1
    %161 = vsyncpa [#allocation4], 1

// kernel: residual_block_forward.6
$region0: #{residual_block_forward.6}
  #allocation0 [shape = 'u32[]', space=smem, size = 0x4, offset = 0x4, fixed_abs, tag = 'smem constant byte address 0x4 - core index']
  #allocation1 [shape = 'u32[144,128]{1,0:T(1,128)}', space=vmem, size = 0x12000, scoped, tag = 'internal scratch']
  %s0 = inlined_call_operand.hbm [shape: bf16[128,36], index: 0, kind: input, shape index: {}]
  %s1 = inlined_call_operand.hbm [shape: bf16[36,128], index: 1, kind: input, shape index: {}]
  %s2 = inlined_call_operand.hbm [shape: f32[128,128], index: 2, kind: output, shape index: {0}]
  %s3 = inlined_call_operand.hbm [shape: f32[1,128], index: 3, kind: output, shape index: {1}]
  %s4 = inlined_call_operand.hbm [shape: f32[1,128], index: 4, kind: output, shape index: {2}]
  %5 = xla_tuple %s2, %s3, %s4
  %s6 = sld [smem:[#allocation0]]
  $region46: #{residual_block_forward.6} parent=0
    _
  %s8 = ssub.s32 1, %s6
  %s9 = scalar_select 0, %s8, %s6
  $region1: #{residual_block_forward.6} parent=0
    #allocation2 [shape = 'u8[32768]{0}', space=vmem, size = 0x8000, scoped, tag = 'input window, operand 0, single buffered']
    #allocation3 [shape = 's32[1]{0}', space=sflag, size = 0x4, scoped, tag = 'scoped memory for residual_block_forward.6']
    #allocation4 [shape = 's32[1]{0}', space=sflag, size = 0x4, scoped, tag = 'scoped memory for residual_block_forward.6']
    #allocation5 [shape = 'u8[10240]{0}', space=vmem, size = 0x2800, scoped, tag = 'input window, operand 1, single buffered']
    #allocation6 [shape = 's32[1]{0}', space=sflag, size = 0x4, scoped, tag = 'scoped memory for residual_block_forward.6']
    #allocation7 [shape = 'u8[65536]{0}', space=vmem, size = 0x10000, scoped, tag = 'output window, operand 0, single buffered']
    #allocation8 [shape = 'u8[512]{0}', space=vmem, size = 0x400, scoped, tag = 'output window, operand 1, single buffered']
    #allocation9 [shape = 's32[1]{0}', space=sflag, size = 0x4, scoped, tag = 'scoped memory for residual_block_forward.6']
    #allocation10 [shape = 'u8[512]{0}', space=vmem, size = 0x400, scoped, tag = 'output window, operand 2, single buffered']
    %10 = vsyncpa [#allocation3], 0
    %11 = vsyncpa [#allocation6], 0
    %12 = vsyncpa [#allocation4], 0
    %13 = vsyncpa [#allocation9], 0
    // Predicated region
    $region2: #{residual_block_forward.6} parent=1 // pred_check
      _
    $region3: #{residual_block_forward.6} parent=1 // pred_check_branch
      %15 = sbr.rel (0) target = $region5
    $region4: #{residual_block_forward.6} parent=1 // pred_region
      %s17 = ssub.s32 1024, 1024
      %18 = vsyncadd [#allocation3], %s17
      %s19 = sshll.u32 [#allocation2], 4
      %s20 = int_to_ptr.vmem [resolvable:$true] %s19
      %25 = dma.hbm_to_vmem [thread:$0]  %s0, 1024, %s20, [#allocation3], 64, 64, 4
    $region5: #{residual_block_forward.6} parent=1 // pred_fallthru
      _
    // Predicated region
    $region6: #{residual_block_forward.6} parent=1 // pred_check
      _
    $region7: #{residual_block_forward.6} parent=1 // pred_check_branch
      %27 = sbr.rel (0) target = $region9
    $region8: #{residual_block_forward.6} parent=1 // pred_region
      %s29 = ssub.s32 320, 320
      %30 = vsyncadd [#allocation6], %s29
      %s31 = sshll.u32 [#allocation5], 4
      %s32 = int_to_ptr.vmem [resolvable:$true] %s31
      %37 = dma.hbm_to_vmem [thread:$0]  %s1, 320, %s32, [#allocation6], 64, 64, 4
    $region9: #{residual_block_forward.6} parent=1 // pred_fallthru
      _
    // Predicated region
    $region10: #{residual_block_forward.6} parent=1 // pred_check
      _
    $region11: #{residual_block_forward.6} parent=1 // pred_check_branch
      %39 = sbr.rel (0) target = $region13
    $region12: #{residual_block_forward.6} parent=1 // pred_region
      %40 = dma.done [#allocation3], 1024
    $region13: #{residual_block_forward.6} parent=1 // pred_fallthru
      _
    // Predicated region
    $region14: #{residual_block_forward.6} parent=1 // pred_check
      _
    $region15: #{residual_block_forward.6} parent=1 // pred_check_branch
      %42 = sbr.rel (0) target = $region17
    $region16: #{residual_block_forward.6} parent=1 // pred_region
      %43 = dma.done [#allocation6], 320
    $region17: #{residual_block_forward.6} parent=1 // pred_fallthru
      _
    %v45 = vld [vmem:[#allocation2] sm:$0xf]
    %v46 = vld [vmem:[#allocation2 + $0x4] sm:$0xf]
    %v47 = vld [vmem:[#allocation2 + $0x8] sm:$0xf]
    %v48 = vld [vmem:[#allocation2 + $0xc] sm:$0xf]
    %v49 = vld [vmem:[#allocation2 + $0x10] sm:$0xf]
    %v50 = vld [vmem:[#allocation2 + $0x14] sm:$0xf]
    %v51 = vld [vmem:[#allocation2 + $0x18] sm:$0xf]
    %v52 = vld [vmem:[#allocation2 + $0x1c] sm:$0xf]
    %v53 = vld [vmem:[#allocation2 + $0x20] sm:$0xf]
    %v54 = vld [vmem:[#allocation2 + $0x24] sm:$0xf]
    %v55 = vld [vmem:[#allocation2 + $0x28] sm:$0xf]
    %v56 = vld [vmem:[#allocation2 + $0x2c] sm:$0xf]
    %v57 = vld [vmem:[#allocation2 + $0x30] sm:$0xf]
    %v58 = vld [vmem:[#allocation2 + $0x34] sm:$0xf]
    %v59 = vld [vmem:[#allocation2 + $0x38] sm:$0xf]
    %v60 = vld [vmem:[#allocation2 + $0x3c] sm:$0xf]
    %v61 = vld [vmem:[#allocation5] sm:$0xf]
    %v62 = vld [vmem:[#allocation5 + $0x4] sm:$0xf]
    %v63 = vld [vmem:[#allocation5 + $0x8] sm:$0xf]
    %v64 = vld [vmem:[#allocation5 + $0xc] sm:$0xf]
    %v65 = vld [vmem:[#allocation5 + $0x10] sm:$0x3]
    %v82 = vunpack.c.l.b16 %v45
    %v83 = vunpack.c.l.b16 %v46
    %v84 = vunpack.c.l.b16 %v47
    %v85 = vunpack.c.l.b16 %v48
    %v86 = vunpack.c.l.b16 %v49
    %v87 = vunpack.c.l.b16 %v50
    %v88 = vunpack.c.l.b16 %v51
    %v89 = vunpack.c.l.b16 %v52
    %v90 = vunpack.c.l.b16 %v53
    %v91 = vunpack.c.l.b16 %v54
    %v92 = vunpack.c.l.b16 %v55
    %v93 = vunpack.c.l.b16 %v56
    %v94 = vunpack.c.l.b16 %v57
    %v95 = vunpack.c.l.b16 %v58
    %v96 = vunpack.c.l.b16 %v59
    %v97 = vunpack.c.l.b16 %v60
    %v98 = vpack.c.b16 %v83, %v82
    %v99 = vpack.c.b16 %v85, %v84
    %v100 = vpack.c.b16 %v87, %v86
    %v101 = vpack.c.b16 %v89, %v88
    %v102 = vpack.c.b16 %v91, %v90
    %v103 = vpack.c.b16 %v93, %v92
    %v104 = vpack.c.b16 %v95, %v94
    %v105 = vpack.c.b16 %v97, %v96
    %v111 = vunpack.c.l.b16 %v61
    %v112 = vunpack.c.l.b16 %v62
    %v113 = vunpack.c.l.b16 %v63
    %v114 = vunpack.c.l.b16 %v64
    %v115 = vunpack.c.l.b16 %v65
    %v116 = vpack.c.b16 %v112, %v111
    %v117 = vpack.c.b16 %v114, %v113
    %v118 = vpack.c.b16 %v115, %v115
    %vm121 = vcmask 293888
    %v123 = vsel %vm121, %v98, 0
    %v126 = vsel %vm121, %v99, 0
    %v129 = vsel %vm121, %v100, 0
    %v132 = vsel %vm121, %v101, 0
    %v135 = vsel %vm121, %v102, 0
    %v138 = vsel %vm121, %v103, 0
    %v141 = vsel %vm121, %v104, 0
    %v144 = vsel %vm121, %v105, 0
    %vm146 = vcmask 1041408
    %v148 = vsel %vm146, %v118, 0
    %150 = vmatprep.subr.bf16.mxu0 0
    %151 = vmatpush1.bf16.msra.mxu0 %v116
    %152 = vmatprep.subr.bf16.mxu0 0
    %153 = vmatpush1.bf16.msra.mxu0 %v117
    %154 = vmatprep.subr.bf16.mxu0 0
    %155 = vmatpush1.bf16.msra.mxu0 %v148
    %156 = vmatprep.subr.bf16.mxu0 0
    %157 = vmatpush1.bf16.msra.mxu0 0
    %158 = vmatprep.subr.bf16.mxu0 0
    %159 = vmatpush1.bf16.msra.mxu0 0
    %160 = vmatprep.subr.bf16.mxu0 0
    %161 = vmatpush1.bf16.msra.mxu0 0
    %162 = vmatprep.subr.bf16.mxu0 0
    %163 = vmatpush1.bf16.msra.mxu0 0
    %164 = vmatprep.subr.bf16.mxu0 0
    %165 = vmatpush1.bf16.msra.mxu0 0
    %166 = vmatprep.subr.bf16.mxu0 0
    %167 = vmatpush1.bf16.msra.mxu0 0
    %168 = vmatprep.subr.bf16.mxu0 0
    %169 = vmatpush1.bf16.msra.mxu0 0
    %170 = vmatprep.subr.bf16.mxu0 0
    %171 = vmatpush1.bf16.msra.mxu0 0
    %172 = vmatprep.subr.bf16.mxu0 0
    %173 = vmatpush1.bf16.msra.mxu0 0
    %174 = vmatprep.subr.bf16.mxu0 0
    %175 = vmatpush1.bf16.msra.mxu0 0
    %176 = vmatprep.subr.bf16.mxu0 0
    %177 = vmatpush1.bf16.msra.mxu0 0
    %178 = vmatprep.subr.bf16.mxu0 0
    %179 = vmatpush1.bf16.msra.mxu0 0
    %180 = vmatprep.subr.bf16.mxu0 0
    %181 = vmatpush1.bf16.msra.mxu0 0
    %182 = vmatprep.mubr.bf16.mxu0 0
    %183 = vmatmul.mubr.bf16.gmra.mrb[0].mxu0 %v123
    %v184 = vpop.f32.mrb[0].mxu0
    %v185 = vadd.f32 0.0, %v184
    %v186 = vpop.f32.mrb[0].mxu0
    %v187 = vpop.f32.mrb[0].mxu0
    %v188 = vadd.f32 0.0, %v187
    %v189 = vpop.f32.mrb[0].mxu0
    %190 = vmatprep.mubr.bf16.mxu0 0
    %191 = vmatmul.mubr.bf16.gmra.mrb[0].mxu0 %v126
    %v192 = vpop.f32.mrb[0].mxu0
    %v193 = vadd.f32 0.0, %v192
    %v194 = vpop.f32.mrb[0].mxu0
    %v195 = vpop.f32.mrb[0].mxu0
    %v196 = vadd.f32 0.0, %v195
    %v197 = vpop.f32.mrb[0].mxu0
    %198 = vmatprep.mubr.bf16.mxu0 0
    %199 = vmatmul.mubr.bf16.gmra.mrb[0].mxu0 %v129
    %v200 = vpop.f32.mrb[0].mxu0
    %v201 = vadd.f32 0.0, %v200
    %v202 = vpop.f32.mrb[0].mxu0
    %v203 = vpop.f32.mrb[0].mxu0
    %v204 = vadd.f32 0.0, %v203
    %v205 = vpop.f32.mrb[0].mxu0
    %206 = vmatprep.mubr.bf16.mxu0 0
    %207 = vmatmul.mubr.bf16.gmra.mrb[0].mxu0 %v132
    %v208 = vpop.f32.mrb[0].mxu0
    %v209 = vadd.f32 0.0, %v208
    %v210 = vpop.f32.mrb[0].mxu0
    %v211 = vpop.f32.mrb[0].mxu0
    %v212 = vadd.f32 0.0, %v211
    %v213 = vpop.f32.mrb[0].mxu0
    %214 = vmatprep.mubr.bf16.mxu0 0
    %215 = vmatmul.mubr.bf16.gmra.mrb[0].mxu0 %v135
    %v216 = vpop.f32.mrb[0].mxu0
    %v217 = vadd.f32 0.0, %v216
    %v218 = vpop.f32.mrb[0].mxu0
    %v219 = vpop.f32.mrb[0].mxu0
    %v220 = vadd.f32 0.0, %v219
    %v221 = vpop.f32.mrb[0].mxu0
    %222 = vmatprep.mubr.bf16.mxu0 0
    %223 = vmatmul.mubr.bf16.gmra.mrb[0].mxu0 %v138
    %v224 = vpop.f32.mrb[0].mxu0
    %v225 = vadd.f32 0.0, %v224
    %v226 = vpop.f32.mrb[0].mxu0
    %v227 = vpop.f32.mrb[0].mxu0
    %v228 = vadd.f32 0.0, %v227
    %v229 = vpop.f32.mrb[0].mxu0
    %230 = vmatprep.mubr.bf16.mxu0 0
    %231 = vmatmul.mubr.bf16.gmra.mrb[0].mxu0 %v141
    %v232 = vpop.f32.mrb[0].mxu0
    %v233 = vadd.f32 0.0, %v232
    %v234 = vpop.f32.mrb[0].mxu0
    %v235 = vpop.f32.mrb[0].mxu0
    %v236 = vadd.f32 0.0, %v235
    %v237 = vpop.f32.mrb[0].mxu0
    %238 = vmatprep.mubr.bf16.mxu0 0
    %239 = vmatmul.mubr.bf16.gmra.mrb[0].mxu0 %v144
    %v240 = vpop.f32.mrb[0].mxu0
    %v241 = vadd.f32 0.0, %v240
    %v242 = vpop.f32.mrb[0].mxu0
    %v243 = vpop.f32.mrb[0].mxu0
    %v244 = vadd.f32 0.0, %v243
    %v245 = vpop.f32.mrb[0].mxu0
    %246 = vdwg.mxu0
    %247 = vst [vmem:[#allocation7] sm:$0xff] %v185
    %248 = vst [vmem:[#allocation7 + $0x8] sm:$0xff] %v188
    %249 = vst [vmem:[#allocation7 + $0x10] sm:$0xff] %v193
    %250 = vst [vmem:[#allocation7 + $0x18] sm:$0xff] %v196
    %251 = vst [vmem:[#allocation7 + $0x20] sm:$0xff] %v201
    %252 = vst [vmem:[#allocation7 + $0x28] sm:$0xff] %v204
    %253 = vst [vmem:[#allocation7 + $0x30] sm:$0xff] %v209
    %254 = vst [vmem:[#allocation7 + $0x38] sm:$0xff] %v212
    %255 = vst [vmem:[#allocation7 + $0x40] sm:$0xff] %v217
    %256 = vst [vmem:[#allocation7 + $0x48] sm:$0xff] %v220
    %257 = vst [vmem:[#allocation7 + $0x50] sm:$0xff] %v225
    %258 = vst [vmem:[#allocation7 + $0x58] sm:$0xff] %v228
    %259 = vst [vmem:[#allocation7 + $0x60] sm:$0xff] %v233
    %260 = vst [vmem:[#allocation7 + $0x68] sm:$0xff] %v236
    %261 = vst [vmem:[#allocation7 + $0x70] sm:$0xff] %v241
    %262 = vst [vmem:[#allocation7 + $0x78] sm:$0xff] %v244
    %p263 = scmp.eq.s32.totalorder 0, 0
    // Predicated region
    $region18: #{residual_block_forward.6} parent=1 // pred_check
      %p264 = pneg %p263
    $region19: #{residual_block_forward.6} parent=1 // pred_check_branch
      %266 = sbr.rel (%p264) target = $region21
    $region20: #{residual_block_forward.6} parent=1 // pred_region
      %267 = vst [vmem:[#allocation8] sm:$0x1] 0.0
      %268 = vst [vmem:[#allocation10] sm:$0x1] 0.0
    $region21: #{residual_block_forward.6} parent=1 // pred_fallthru
      _
    %v269 = vld [vmem:[#allocation8] sm:$0x1]
    %v270 = vadd.f32 %v185, %v188
    %v271 = vadd.f32 %v270, %v193
    %v272 = vadd.f32 %v271, %v196
    %v273 = vadd.f32 %v272, %v201
    %v274 = vadd.f32 %v273, %v204
    %v275 = vadd.f32 %v274, %v209
    %v276 = vadd.f32 %v275, %v212
    %v277 = vadd.f32 %v276, %v217
    %v278 = vadd.f32 %v277, %v220
    %v279 = vadd.f32 %v278, %v225
    %v280 = vadd.f32 %v279, %v228
    %v281 = vadd.f32 %v280, %v233
    %v282 = vadd.f32 %v281, %v236
    %v283 = vadd.f32 %v282, %v241
    %v284 = vadd.f32 %v283, %v244
    %v285 = vrot.slane %v284, 4
    %v286 = vadd.f32 %v284, %v285
    %v287 = vrot.slane %v286, 2
    %v288 = vadd.f32 %v286, %v287
    %v289 = vrot.slane %v288, 1
    %v290 = vadd.f32 %v288, %v289
    %v291 = vadd.f32 %v269, %v290
    %292 = vst [vmem:[#allocation8] sm:$0x1] %v291
    %v293 = vld [vmem:[#allocation10] sm:$0x1]
    %v294 = vmul.f32 %v185, %v185
    %v295 = vmul.f32 %v188, %v188
    %v296 = vmul.f32 %v193, %v193
    %v297 = vmul.f32 %v196, %v196
    %v298 = vmul.f32 %v201, %v201
    %v299 = vmul.f32 %v204, %v204
    %v300 = vmul.f32 %v209, %v209
    %v301 = vmul.f32 %v212, %v212
    %v302 = vmul.f32 %v217, %v217
    %v303 = vmul.f32 %v220, %v220
    %v304 = vmul.f32 %v225, %v225
    %v305 = vmul.f32 %v228, %v228
    %v306 = vmul.f32 %v233, %v233
    %v307 = vmul.f32 %v236, %v236
    %v308 = vmul.f32 %v241, %v241
    %v309 = vmul.f32 %v244, %v244
    %v310 = vadd.f32 %v294, %v295
    %v311 = vadd.f32 %v310, %v296
    %v312 = vadd.f32 %v311, %v297
    %v313 = vadd.f32 %v312, %v298
    %v314 = vadd.f32 %v313, %v299
    %v315 = vadd.f32 %v314, %v300
    %v316 = vadd.f32 %v315, %v301
    %v317 = vadd.f32 %v316, %v302
    %v318 = vadd.f32 %v317, %v303
    %v319 = vadd.f32 %v318, %v304
    %v320 = vadd.f32 %v319, %v305
    %v321 = vadd.f32 %v320, %v306
    %v322 = vadd.f32 %v321, %v307
    %v323 = vadd.f32 %v322, %v308
    %v324 = vadd.f32 %v323, %v309
    %v325 = vrot.slane %v324, 4
    %v326 = vadd.f32 %v324, %v325
    %v327 = vrot.slane %v326, 2
    %v328 = vadd.f32 %v326, %v327
    %v329 = vrot.slane %v328, 1
    %v330 = vadd.f32 %v328, %v329
    %v331 = vadd.f32 %v293, %v330
    %332 = vst [vmem:[#allocation10] sm:$0x1] %v331
    // Predicated region
    $region22: #{residual_block_forward.6} parent=1 // pred_check
      _
    $region23: #{residual_block_forward.6} parent=1 // pred_check_branch
      %334 = sbr.rel (0) target = $region25
    $region24: #{residual_block_forward.6} parent=1 // pred_region
      %s336 = ssub.s32 2048, 2048
      %337 = vsyncadd [#allocation4], %s336
      %s338 = sshll.u32 [#allocation7], 4
      %s339 = int_to_ptr.vmem [resolvable:$true] %s338
      %344 = dma.vmem_to_hbm [thread:$0]  %s339, 2048, %s2, [#allocation4], 128, 128, 8
    $region25: #{residual_block_forward.6} parent=1 // pred_fallthru
      _
    // Predicated region
    $region26: #{residual_block_forward.6} parent=1 // pred_check
      _
    $region27: #{residual_block_forward.6} parent=1 // pred_check_branch
      %346 = sbr.rel (0) target = $region29
    $region28: #{residual_block_forward.6} parent=1 // pred_region
      %s348 = ssub.s32 16, 16
      %349 = vsyncadd [#allocation9], %s348
      %s351 = sshll.u32 [#allocation8], 4
      %s352 = int_to_ptr.vmem [resolvable:$true] %s351
      %354 = dma.vmem_to_hbm [thread:$0]  %s352, 16, %s3, [#allocation9]
    $region29: #{residual_block_forward.6} parent=1 // pred_fallthru
      _
    // Predicated region
    $region30: #{residual_block_forward.6} parent=1 // pred_check
      _
    $region31: #{residual_block_forward.6} parent=1 // pred_check_branch
      %356 = sbr.rel (0) target = $region33
    $region32: #{residual_block_forward.6} parent=1 // pred_region
      %s358 = ssub.s32 16, 16
      %359 = vsyncadd [#allocation9], %s358
      %s361 = sshll.u32 [#allocation10], 4
      %s362 = int_to_ptr.vmem [resolvable:$true] %s361
      %364 = dma.vmem_to_hbm [thread:$0]  %s362, 16, %s4, [#allocation9]
    $region33: #{residual_block_forward.6} parent=1 // pred_fallthru
      _
    // Predicated region
    $region34: #{residual_block_forward.6} parent=1 // pred_check
      _
    $region35: #{residual_block_forward.6} parent=1 // pred_check_branch
      %366 = sbr.rel (0) target = $region37
    $region36: #{residual_block_forward.6} parent=1 // pred_region
      %367 = dma.done [#allocation4], 2048
    $region37: #{residual_block_forward.6} parent=1 // pred_fallthru
      _
    // Predicated region
    $region38: #{residual_block_forward.6} parent=1 // pred_check
      _
    $region39: #{residual_block_forward.6} parent=1 // pred_check_branch
      %369 = sbr.rel (0) target = $region41
    $region40: #{residual_block_forward.6} parent=1 // pred_region
      %370 = dma.done [#allocation9], 16
    $region41: #{residual_block_forward.6} parent=1 // pred_fallthru
      _
    // Predicated region
    $region42: #{residual_block_forward.6} parent=1 // pred_check
      _
    $region43: #{residual_block_forward.6} parent=1 // pred_check_branch
      %372 = sbr.rel (0) target = $region45
    $region44: #{residual_block_forward.6} parent=1 // pred_region
      %373 = dma.done [#allocation9], 16
    $region45: #{residual_block_forward.6} parent=1 // pred_fallthru
      _
    %374 = vsyncpa [#allocation3], 1
    %375 = vsyncpa [#allocation6], 1
    %376 = vsyncpa [#allocation4], 1
    %377 = vsyncpa [#allocation9], 1

// kernel: residual_block_forward.10
$region0: #{residual_block_forward.10}
  #allocation0 [shape = 'u32[]', space=smem, size = 0x4, offset = 0x4, fixed_abs, tag = 'smem constant byte address 0x4 - core index']
  #allocation1 [shape = 'u32[144,128]{1,0:T(1,128)}', space=vmem, size = 0x12000, scoped, tag = 'internal scratch']
  %s0 = inlined_call_operand.hbm [shape: bf16[128,72], index: 0, kind: input, shape index: {}]
  %s1 = inlined_call_operand.hbm [shape: bf16[72,128], index: 1, kind: input, shape index: {}]
  %s2 = inlined_call_operand.hbm [shape: f32[128,128], index: 2, kind: output, shape index: {0}]
  %s3 = inlined_call_operand.hbm [shape: f32[1,128], index: 3, kind: output, shape index: {1}]
  %s4 = inlined_call_operand.hbm [shape: f32[1,128], index: 4, kind: output, shape index: {2}]
  %5 = xla_tuple %s2, %s3, %s4
  %s6 = sld [smem:[#allocation0]]
  $region46: #{residual_block_forward.10} parent=0
    _
  %s8 = ssub.s32 1, %s6
  %s9 = scalar_select 0, %s8, %s6
  $region1: #{residual_block_forward.10} parent=0
    #allocation2 [shape = 'u8[32768]{0}', space=vmem, size = 0x8000, scoped, tag = 'input window, operand 0, single buffered']
    #allocation3 [shape = 's32[1]{0}', space=sflag, size = 0x4, scoped, tag = 'scoped memory for residual_block_forward.10']
    #allocation4 [shape = 's32[1]{0}', space=sflag, size = 0x4, scoped, tag = 'scoped memory for residual_block_forward.10']
    #allocation5 [shape = 'u8[18432]{0}', space=vmem, size = 0x4800, scoped, tag = 'input window, operand 1, single buffered']
    #allocation6 [shape = 's32[1]{0}', space=sflag, size = 0x4, scoped, tag = 'scoped memory for residual_block_forward.10']
    #allocation7 [shape = 'u8[65536]{0}', space=vmem, size = 0x10000, scoped, tag = 'output window, operand 0, single buffered']
    #allocation8 [shape = 'u8[512]{0}', space=vmem, size = 0x400, scoped, tag = 'output window, operand 1, single buffered']
    #allocation9 [shape = 's32[1]{0}', space=sflag, size = 0x4, scoped, tag = 'scoped memory for residual_block_forward.10']
    #allocation10 [shape = 'u8[512]{0}', space=vmem, size = 0x400, scoped, tag = 'output window, operand 2, single buffered']
    %10 = vsyncpa [#allocation3], 0
    %11 = vsyncpa [#allocation6], 0
    %12 = vsyncpa [#allocation4], 0
    %13 = vsyncpa [#allocation9], 0
    // Predicated region
    $region2: #{residual_block_forward.10} parent=1 // pred_check
      _
    $region3: #{residual_block_forward.10} parent=1 // pred_check_branch
      %15 = sbr.rel (0) target = $region5
    $region4: #{residual_block_forward.10} parent=1 // pred_region
      %s17 = ssub.s32 1024, 1024
      %18 = vsyncadd [#allocation3], %s17
      %s19 = sshll.u32 [#allocation2], 4
      %s20 = int_to_ptr.vmem [resolvable:$true] %s19
      %25 = dma.hbm_to_vmem [thread:$0]  %s0, 1024, %s20, [#allocation3], 64, 64, 4
    $region5: #{residual_block_forward.10} parent=1 // pred_fallthru
      _
    // Predicated region
    $region6: #{residual_block_forward.10} parent=1 // pred_check
      _
    $region7: #{residual_block_forward.10} parent=1 // pred_check_branch
      %27 = sbr.rel (0) target = $region9
    $region8: #{residual_block_forward.10} parent=1 // pred_region
      %s29 = ssub.s32 576, 576
      %30 = vsyncadd [#allocation6], %s29
      %s31 = sshll.u32 [#allocation5], 4
      %s32 = int_to_ptr.vmem [resolvable:$true] %s31
      %37 = dma.hbm_to_vmem [thread:$0]  %s1, 576, %s32, [#allocation6], 64, 64, 4
    $region9: #{residual_block_forward.10} parent=1 // pred_fallthru
      _
    // Predicated region
    $region10: #{residual_block_forward.10} parent=1 // pred_check
      _
    $region11: #{residual_block_forward.10} parent=1 // pred_check_branch
      %39 = sbr.rel (0) target = $region13
    $region12: #{residual_block_forward.10} parent=1 // pred_region
      %40 = dma.done [#allocation3], 1024
    $region13: #{residual_block_forward.10} parent=1 // pred_fallthru
      _
    // Predicated region
    $region14: #{residual_block_forward.10} parent=1 // pred_check
      _
    $region15: #{residual_block_forward.10} parent=1 // pred_check_branch
      %42 = sbr.rel (0) target = $region17
    $region16: #{residual_block_forward.10} parent=1 // pred_region
      %43 = dma.done [#allocation6], 576
    $region17: #{residual_block_forward.10} parent=1 // pred_fallthru
      _
    %v45 = vld [vmem:[#allocation2] sm:$0xf]
    %v46 = vld [vmem:[#allocation2 + $0x4] sm:$0xf]
    %v47 = vld [vmem:[#allocation2 + $0x8] sm:$0xf]
    %v48 = vld [vmem:[#allocation2 + $0xc] sm:$0xf]
    %v49 = vld [vmem:[#allocation2 + $0x10] sm:$0xf]
    %v50 = vld [vmem:[#allocation2 + $0x14] sm:$0xf]
    %v51 = vld [vmem:[#allocation2 + $0x18] sm:$0xf]
    %v52 = vld [vmem:[#allocation2 + $0x1c] sm:$0xf]
    %v53 = vld [vmem:[#allocation2 + $0x20] sm:$0xf]
    %v54 = vld [vmem:[#allocation2 + $0x24] sm:$0xf]
    %v55 = vld [vmem:[#allocation2 + $0x28] sm:$0xf]
    %v56 = vld [vmem:[#allocation2 + $0x2c] sm:$0xf]
    %v57 = vld [vmem:[#allocation2 + $0x30] sm:$0xf]
    %v58 = vld [vmem:[#allocation2 + $0x34] sm:$0xf]
    %v59 = vld [vmem:[#allocation2 + $0x38] sm:$0xf]
    %v60 = vld [vmem:[#allocation2 + $0x3c] sm:$0xf]
    %v61 = vld [vmem:[#allocation5] sm:$0xf]
    %v62 = vld [vmem:[#allocation5 + $0x4] sm:$0xf]
    %v63 = vld [vmem:[#allocation5 + $0x8] sm:$0xf]
    %v64 = vld [vmem:[#allocation5 + $0xc] sm:$0xf]
    %v65 = vld [vmem:[#allocation5 + $0x10] sm:$0xf]
    %v66 = vld [vmem:[#allocation5 + $0x14] sm:$0xf]
    %v67 = vld [vmem:[#allocation5 + $0x18] sm:$0xf]
    %v68 = vld [vmem:[#allocation5 + $0x1c] sm:$0xf]
    %v69 = vld [vmem:[#allocation5 + $0x20] sm:$0xf]
    %v86 = vunpack.c.l.b16 %v45
    %v87 = vunpack.c.l.b16 %v46
    %v88 = vunpack.c.l.b16 %v47
    %v89 = vunpack.c.l.b16 %v48
    %v90 = vunpack.c.l.b16 %v49
    %v91 = vunpack.c.l.b16 %v50
    %v92 = vunpack.c.l.b16 %v51
    %v93 = vunpack.c.l.b16 %v52
    %v94 = vunpack.c.l.b16 %v53
    %v95 = vunpack.c.l.b16 %v54
    %v96 = vunpack.c.l.b16 %v55
    %v97 = vunpack.c.l.b16 %v56
    %v98 = vunpack.c.l.b16 %v57
    %v99 = vunpack.c.l.b16 %v58
    %v100 = vunpack.c.l.b16 %v59
    %v101 = vunpack.c.l.b16 %v60
    %v102 = vpack.c.b16 %v87, %v86
    %v103 = vpack.c.b16 %v89, %v88
    %v104 = vpack.c.b16 %v91, %v90
    %v105 = vpack.c.b16 %v93, %v92
    %v106 = vpack.c.b16 %v95, %v94
    %v107 = vpack.c.b16 %v97, %v96
    %v108 = vpack.c.b16 %v99, %v98
    %v109 = vpack.c.b16 %v101, %v100
    %v119 = vunpack.c.l.b16 %v61
    %v120 = vunpack.c.l.b16 %v62
    %v121 = vunpack.c.l.b16 %v63
    %v122 = vunpack.c.l.b16 %v64
    %v123 = vunpack.c.l.b16 %v65
    %v124 = vunpack.c.l.b16 %v66
    %v125 = vunpack.c.l.b16 %v67
    %v126 = vunpack.c.l.b16 %v68
    %v127 = vunpack.c.l.b16 %v69
    %v128 = vpack.c.b16 %v120, %v119
    %v129 = vpack.c.b16 %v122, %v121
    %v130 = vpack.c.b16 %v124, %v123
    %v131 = vpack.c.b16 %v126, %v125
    %v132 = vpack.c.b16 %v127, %v127
    %vm137 = vcmask 588800
    %v139 = vsel %vm137, %v102, 0
    %v142 = vsel %vm137, %v103, 0
    %v145 = vsel %vm137, %v104, 0
    %v148 = vsel %vm137, %v105, 0
    %v151 = vsel %vm137, %v106, 0
    %v154 = vsel %vm137, %v107, 0
    %v157 = vsel %vm137, %v108, 0
    %v160 = vsel %vm137, %v109, 0
    %vm162 = vcmask 1043456
    %v164 = vsel %vm162, %v132, 0
    %166 = vmatprep.subr.bf16.mxu0 0
    %167 = vmatpush1.bf16.msra.mxu0 %v128
    %168 = vmatprep.subr.bf16.mxu0 0
    %169 = vmatpush1.bf16.msra.mxu0 %v129
    %170 = vmatprep.subr.bf16.mxu0 0
    %171 = vmatpush1.bf16.msra.mxu0 %v130
    %172 = vmatprep.subr.bf16.mxu0 0
    %173 = vmatpush1.bf16.msra.mxu0 %v131
    %174 = vmatprep.subr.bf16.mxu0 0
    %175 = vmatpush1.bf16.msra.mxu0 %v164
    %176 = vmatprep.subr.bf16.mxu0 0
    %177 = vmatpush1.bf16.msra.mxu0 0
    %178 = vmatprep.subr.bf16.mxu0 0
    %179 = vmatpush1.bf16.msra.mxu0 0
    %180 = vmatprep.subr.bf16.mxu0 0
    %181 = vmatpush1.bf16.msra.mxu0 0
    %182 = vmatprep.subr.bf16.mxu0 0
    %183 = vmatpush1.bf16.msra.mxu0 0
    %184 = vmatprep.subr.bf16.mxu0 0
    %185 = vmatpush1.bf16.msra.mxu0 0
    %186 = vmatprep.subr.bf16.mxu0 0
    %187 = vmatpush1.bf16.msra.mxu0 0
    %188 = vmatprep.subr.bf16.mxu0 0
    %189 = vmatpush1.bf16.msra.mxu0 0
    %190 = vmatprep.subr.bf16.mxu0 0
    %191 = vmatpush1.bf16.msra.mxu0 0
    %192 = vmatprep.subr.bf16.mxu0 0
    %193 = vmatpush1.bf16.msra.mxu0 0
    %194 = vmatprep.subr.bf16.mxu0 0
    %195 = vmatpush1.bf16.msra.mxu0 0
    %196 = vmatprep.subr.bf16.mxu0 0
    %197 = vmatpush1.bf16.msra.mxu0 0
    %198 = vmatprep.mubr.bf16.mxu0 0
    %199 = vmatmul.mubr.bf16.gmra.mrb[0].mxu0 %v139
    %v200 = vpop.f32.mrb[0].mxu0
    %v201 = vadd.f32 0.0, %v200
    %v202 = vpop.f32.mrb[0].mxu0
    %v203 = vpop.f32.mrb[0].mxu0
    %v204 = vadd.f32 0.0, %v203
    %v205 = vpop.f32.mrb[0].mxu0
    %206 = vmatprep.mubr.bf16.mxu0 0
    %207 = vmatmul.mubr.bf16.gmra.mrb[0].mxu0 %v142
    %v208 = vpop.f32.mrb[0].mxu0
    %v209 = vadd.f32 0.0, %v208
    %v210 = vpop.f32.mrb[0].mxu0
    %v211 = vpop.f32.mrb[0].mxu0
    %v212 = vadd.f32 0.0, %v211
    %v213 = vpop.f32.mrb[0].mxu0
    %214 = vmatprep.mubr.bf16.mxu0 0
    %215 = vmatmul.mubr.bf16.gmra.mrb[0].mxu0 %v145
    %v216 = vpop.f32.mrb[0].mxu0
    %v217 = vadd.f32 0.0, %v216
    %v218 = vpop.f32.mrb[0].mxu0
    %v219 = vpop.f32.mrb[0].mxu0
    %v220 = vadd.f32 0.0, %v219
    %v221 = vpop.f32.mrb[0].mxu0
    %222 = vmatprep.mubr.bf16.mxu0 0
    %223 = vmatmul.mubr.bf16.gmra.mrb[0].mxu0 %v148
    %v224 = vpop.f32.mrb[0].mxu0
    %v225 = vadd.f32 0.0, %v224
    %v226 = vpop.f32.mrb[0].mxu0
    %v227 = vpop.f32.mrb[0].mxu0
    %v228 = vadd.f32 0.0, %v227
    %v229 = vpop.f32.mrb[0].mxu0
    %230 = vmatprep.mubr.bf16.mxu0 0
    %231 = vmatmul.mubr.bf16.gmra.mrb[0].mxu0 %v151
    %v232 = vpop.f32.mrb[0].mxu0
    %v233 = vadd.f32 0.0, %v232
    %v234 = vpop.f32.mrb[0].mxu0
    %v235 = vpop.f32.mrb[0].mxu0
    %v236 = vadd.f32 0.0, %v235
    %v237 = vpop.f32.mrb[0].mxu0
    %238 = vmatprep.mubr.bf16.mxu0 0
    %239 = vmatmul.mubr.bf16.gmra.mrb[0].mxu0 %v154
    %v240 = vpop.f32.mrb[0].mxu0
    %v241 = vadd.f32 0.0, %v240
    %v242 = vpop.f32.mrb[0].mxu0
    %v243 = vpop.f32.mrb[0].mxu0
    %v244 = vadd.f32 0.0, %v243
    %v245 = vpop.f32.mrb[0].mxu0
    %246 = vmatprep.mubr.bf16.mxu0 0
    %247 = vmatmul.mubr.bf16.gmra.mrb[0].mxu0 %v157
    %v248 = vpop.f32.mrb[0].mxu0
    %v249 = vadd.f32 0.0, %v248
    %v250 = vpop.f32.mrb[0].mxu0
    %v251 = vpop.f32.mrb[0].mxu0
    %v252 = vadd.f32 0.0, %v251
    %v253 = vpop.f32.mrb[0].mxu0
    %254 = vmatprep.mubr.bf16.mxu0 0
    %255 = vmatmul.mubr.bf16.gmra.mrb[0].mxu0 %v160
    %v256 = vpop.f32.mrb[0].mxu0
    %v257 = vadd.f32 0.0, %v256
    %v258 = vpop.f32.mrb[0].mxu0
    %v259 = vpop.f32.mrb[0].mxu0
    %v260 = vadd.f32 0.0, %v259
    %v261 = vpop.f32.mrb[0].mxu0
    %262 = vdwg.mxu0
    %263 = vst [vmem:[#allocation7] sm:$0xff] %v201
    %264 = vst [vmem:[#allocation7 + $0x8] sm:$0xff] %v204
    %265 = vst [vmem:[#allocation7 + $0x10] sm:$0xff] %v209
    %266 = vst [vmem:[#allocation7 + $0x18] sm:$0xff] %v212
    %267 = vst [vmem:[#allocation7 + $0x20] sm:$0xff] %v217
    %268 = vst [vmem:[#allocation7 + $0x28] sm:$0xff] %v220
    %269 = vst [vmem:[#allocation7 + $0x30] sm:$0xff] %v225
    %270 = vst [vmem:[#allocation7 + $0x38] sm:$0xff] %v228
    %271 = vst [vmem:[#allocation7 + $0x40] sm:$0xff] %v233
    %272 = vst [vmem:[#allocation7 + $0x48] sm:$0xff] %v236
    %273 = vst [vmem:[#allocation7 + $0x50] sm:$0xff] %v241
    %274 = vst [vmem:[#allocation7 + $0x58] sm:$0xff] %v244
    %275 = vst [vmem:[#allocation7 + $0x60] sm:$0xff] %v249
    %276 = vst [vmem:[#allocation7 + $0x68] sm:$0xff] %v252
    %277 = vst [vmem:[#allocation7 + $0x70] sm:$0xff] %v257
    %278 = vst [vmem:[#allocation7 + $0x78] sm:$0xff] %v260
    %p279 = scmp.eq.s32.totalorder 0, 0
    // Predicated region
    $region18: #{residual_block_forward.10} parent=1 // pred_check
      %p280 = pneg %p279
    $region19: #{residual_block_forward.10} parent=1 // pred_check_branch
      %282 = sbr.rel (%p280) target = $region21
    $region20: #{residual_block_forward.10} parent=1 // pred_region
      %283 = vst [vmem:[#allocation8] sm:$0x1] 0.0
      %284 = vst [vmem:[#allocation10] sm:$0x1] 0.0
    $region21: #{residual_block_forward.10} parent=1 // pred_fallthru
      _
    %v285 = vld [vmem:[#allocation8] sm:$0x1]
    %v286 = vadd.f32 %v201, %v204
    %v287 = vadd.f32 %v286, %v209
    %v288 = vadd.f32 %v287, %v212
    %v289 = vadd.f32 %v288, %v217
    %v290 = vadd.f32 %v289, %v220
    %v291 = vadd.f32 %v290, %v225
    %v292 = vadd.f32 %v291, %v228
    %v293 = vadd.f32 %v292, %v233
    %v294 = vadd.f32 %v293, %v236
    %v295 = vadd.f32 %v294, %v241
    %v296 = vadd.f32 %v295, %v244
    %v297 = vadd.f32 %v296, %v249
    %v298 = vadd.f32 %v297, %v252
    %v299 = vadd.f32 %v298, %v257
    %v300 = vadd.f32 %v299, %v260
    %v301 = vrot.slane %v300, 4
    %v302 = vadd.f32 %v300, %v301
    %v303 = vrot.slane %v302, 2
    %v304 = vadd.f32 %v302, %v303
    %v305 = vrot.slane %v304, 1
    %v306 = vadd.f32 %v304, %v305
    %v307 = vadd.f32 %v285, %v306
    %308 = vst [vmem:[#allocation8] sm:$0x1] %v307
    %v309 = vld [vmem:[#allocation10] sm:$0x1]
    %v310 = vmul.f32 %v201, %v201
    %v311 = vmul.f32 %v204, %v204
    %v312 = vmul.f32 %v209, %v209
    %v313 = vmul.f32 %v212, %v212
    %v314 = vmul.f32 %v217, %v217
    %v315 = vmul.f32 %v220, %v220
    %v316 = vmul.f32 %v225, %v225
    %v317 = vmul.f32 %v228, %v228
    %v318 = vmul.f32 %v233, %v233
    %v319 = vmul.f32 %v236, %v236
    %v320 = vmul.f32 %v241, %v241
    %v321 = vmul.f32 %v244, %v244
    %v322 = vmul.f32 %v249, %v249
    %v323 = vmul.f32 %v252, %v252
    %v324 = vmul.f32 %v257, %v257
    %v325 = vmul.f32 %v260, %v260
    %v326 = vadd.f32 %v310, %v311
    %v327 = vadd.f32 %v326, %v312
    %v328 = vadd.f32 %v327, %v313
    %v329 = vadd.f32 %v328, %v314
    %v330 = vadd.f32 %v329, %v315
    %v331 = vadd.f32 %v330, %v316
    %v332 = vadd.f32 %v331, %v317
    %v333 = vadd.f32 %v332, %v318
    %v334 = vadd.f32 %v333, %v319
    %v335 = vadd.f32 %v334, %v320
    %v336 = vadd.f32 %v335, %v321
    %v337 = vadd.f32 %v336, %v322
    %v338 = vadd.f32 %v337, %v323
    %v339 = vadd.f32 %v338, %v324
    %v340 = vadd.f32 %v339, %v325
    %v341 = vrot.slane %v340, 4
    %v342 = vadd.f32 %v340, %v341
    %v343 = vrot.slane %v342, 2
    %v344 = vadd.f32 %v342, %v343
    %v345 = vrot.slane %v344, 1
    %v346 = vadd.f32 %v344, %v345
    %v347 = vadd.f32 %v309, %v346
    %348 = vst [vmem:[#allocation10] sm:$0x1] %v347
    // Predicated region
    $region22: #{residual_block_forward.10} parent=1 // pred_check
      _
    $region23: #{residual_block_forward.10} parent=1 // pred_check_branch
      %350 = sbr.rel (0) target = $region25
    $region24: #{residual_block_forward.10} parent=1 // pred_region
      %s352 = ssub.s32 2048, 2048
      %353 = vsyncadd [#allocation4], %s352
      %s354 = sshll.u32 [#allocation7], 4
      %s355 = int_to_ptr.vmem [resolvable:$true] %s354
      %360 = dma.vmem_to_hbm [thread:$0]  %s355, 2048, %s2, [#allocation4], 128, 128, 8
    $region25: #{residual_block_forward.10} parent=1 // pred_fallthru
      _
    // Predicated region
    $region26: #{residual_block_forward.10} parent=1 // pred_check
      _
    $region27: #{residual_block_forward.10} parent=1 // pred_check_branch
      %362 = sbr.rel (0) target = $region29
    $region28: #{residual_block_forward.10} parent=1 // pred_region
      %s364 = ssub.s32 16, 16
      %365 = vsyncadd [#allocation9], %s364
      %s367 = sshll.u32 [#allocation8], 4
      %s368 = int_to_ptr.vmem [resolvable:$true] %s367
      %370 = dma.vmem_to_hbm [thread:$0]  %s368, 16, %s3, [#allocation9]
    $region29: #{residual_block_forward.10} parent=1 // pred_fallthru
      _
    // Predicated region
    $region30: #{residual_block_forward.10} parent=1 // pred_check
      _
    $region31: #{residual_block_forward.10} parent=1 // pred_check_branch
      %372 = sbr.rel (0) target = $region33
    $region32: #{residual_block_forward.10} parent=1 // pred_region
      %s374 = ssub.s32 16, 16
      %375 = vsyncadd [#allocation9], %s374
      %s377 = sshll.u32 [#allocation10], 4
      %s378 = int_to_ptr.vmem [resolvable:$true] %s377
      %380 = dma.vmem_to_hbm [thread:$0]  %s378, 16, %s4, [#allocation9]
    $region33: #{residual_block_forward.10} parent=1 // pred_fallthru
      _
    // Predicated region
    $region34: #{residual_block_forward.10} parent=1 // pred_check
      _
    $region35: #{residual_block_forward.10} parent=1 // pred_check_branch
      %382 = sbr.rel (0) target = $region37
    $region36: #{residual_block_forward.10} parent=1 // pred_region
      %383 = dma.done [#allocation4], 2048
    $region37: #{residual_block_forward.10} parent=1 // pred_fallthru
      _
    // Predicated region
    $region38: #{residual_block_forward.10} parent=1 // pred_check
      _
    $region39: #{residual_block_forward.10} parent=1 // pred_check_branch
      %385 = sbr.rel (0) target = $region41
    $region40: #{residual_block_forward.10} parent=1 // pred_region
      %386 = dma.done [#allocation9], 16
    $region41: #{residual_block_forward.10} parent=1 // pred_fallthru
      _
    // Predicated region
    $region42: #{residual_block_forward.10} parent=1 // pred_check
      _
    $region43: #{residual_block_forward.10} parent=1 // pred_check_branch
      %388 = sbr.rel (0) target = $region45
    $region44: #{residual_block_forward.10} parent=1 // pred_region
      %389 = dma.done [#allocation9], 16
    $region45: #{residual_block_forward.10} parent=1 // pred_fallthru
      _
    %390 = vsyncpa [#allocation3], 1
    %391 = vsyncpa [#allocation6], 1
    %392 = vsyncpa [#allocation4], 1
    %393 = vsyncpa [#allocation9], 1

// kernel: residual_block_forward.9
$region0: #{residual_block_forward.9}
  #allocation0 [shape = 'u32[]', space=smem, size = 0x4, offset = 0x4, fixed_abs, tag = 'smem constant byte address 0x4 - core index']
  #allocation1 [shape = 'u32[144,128]{1,0:T(1,128)}', space=vmem, size = 0x12000, scoped, tag = 'internal scratch']
  %s0 = inlined_call_operand.hbm [shape: f32[128,128], index: 0, kind: input, shape index: {}]
  %s1 = inlined_call_operand.hbm [shape: f32[8,128], index: 1, kind: input, shape index: {}]
  %s2 = inlined_call_operand.hbm [shape: f32[128,128], index: 2, kind: output, shape index: {}]
  %s3 = sld [smem:[#allocation0]]
  $region26: #{residual_block_forward.9} parent=0
    _
  %s5 = ssub.s32 1, %s3
  %s6 = scalar_select 0, %s5, %s3
  $region1: #{residual_block_forward.9} parent=0
    #allocation2 [shape = 'u8[65536]{0}', space=vmem, size = 0x10000, scoped, tag = 'input window, operand 0, single buffered']
    #allocation3 [shape = 's32[1]{0}', space=sflag, size = 0x4, scoped, tag = 'scoped memory for residual_block_forward.9']
    #allocation4 [shape = 's32[1]{0}', space=sflag, size = 0x4, scoped, tag = 'scoped memory for residual_block_forward.9']
    #allocation5 [shape = 'u8[4096]{0}', space=vmem, size = 0x1000, scoped, tag = 'input window, operand 1, single buffered']
    #allocation6 [shape = 's32[1]{0}', space=sflag, size = 0x4, scoped, tag = 'scoped memory for residual_block_forward.9']
    #allocation7 [shape = 'u8[65536]{0}', space=vmem, size = 0x10000, scoped, tag = 'output window, operand 0, single buffered']
    %7 = vsyncpa [#allocation3], 0
    %8 = vsyncpa [#allocation6], 0
    %9 = vsyncpa [#allocation4], 0
    // Predicated region
    $region2: #{residual_block_forward.9} parent=1 // pred_check
      _
    $region3: #{residual_block_forward.9} parent=1 // pred_check_branch
      %11 = sbr.rel (0) target = $region5
    $region4: #{residual_block_forward.9} parent=1 // pred_region
      %s13 = ssub.s32 2048, 2048
      %14 = vsyncadd [#allocation3], %s13
      %s15 = sshll.u32 [#allocation2], 4
      %s16 = int_to_ptr.vmem [resolvable:$true] %s15
      %21 = dma.hbm_to_vmem [thread:$0]  %s0, 2048, %s16, [#allocation3], 128, 128, 8
    $region5: #{residual_block_forward.9} parent=1 // pred_fallthru
      _
    // Predicated region
    $region6: #{residual_block_forward.9} parent=1 // pred_check
      _
    $region7: #{residual_block_forward.9} parent=1 // pred_check_branch
      %23 = sbr.rel (0) target = $region9
    $region8: #{residual_block_forward.9} parent=1 // pred_region
      %s25 = ssub.s32 128, 128
      %26 = vsyncadd [#allocation6], %s25
      %s28 = sshll.u32 [#allocation5], 4
      %s29 = int_to_ptr.vmem [resolvable:$true] %s28
      %31 = dma.hbm_to_vmem [thread:$0]  %s1, 128, %s29, [#allocation6]
    $region9: #{residual_block_forward.9} parent=1 // pred_fallthru
      _
    // Predicated region
    $region10: #{residual_block_forward.9} parent=1 // pred_check
      _
    $region11: #{residual_block_forward.9} parent=1 // pred_check_branch
      %33 = sbr.rel (0) target = $region13
    $region12: #{residual_block_forward.9} parent=1 // pred_region
      %34 = dma.done [#allocation3], 2048
    $region13: #{residual_block_forward.9} parent=1 // pred_fallthru
      _
    // Predicated region
    $region14: #{residual_block_forward.9} parent=1 // pred_check
      _
    $region15: #{residual_block_forward.9} parent=1 // pred_check_branch
      %36 = sbr.rel (0) target = $region17
    $region16: #{residual_block_forward.9} parent=1 // pred_region
      %37 = dma.done [#allocation6], 128
    $region17: #{residual_block_forward.9} parent=1 // pred_fallthru
      _
    %v38 = vld [vmem:[#allocation5] sm:$0x1]
    %v39 = vld [vmem:[#allocation5 + $0x1] sm:$0x1]
    %v40 = vld [vmem:[#allocation2] sm:$0xff]
    %v41 = vld [vmem:[#allocation2 + $0x8] sm:$0xff]
    %v42 = vld [vmem:[#allocation2 + $0x10] sm:$0xff]
    %v43 = vld [vmem:[#allocation2 + $0x18] sm:$0xff]
    %v44 = vld [vmem:[#allocation2 + $0x20] sm:$0xff]
    %v45 = vld [vmem:[#allocation2 + $0x28] sm:$0xff]
    %v46 = vld [vmem:[#allocation2 + $0x30] sm:$0xff]
    %v47 = vld [vmem:[#allocation2 + $0x38] sm:$0xff]
    %v48 = vld [vmem:[#allocation2 + $0x40] sm:$0xff]
    %v49 = vld [vmem:[#allocation2 + $0x48] sm:$0xff]
    %v50 = vld [vmem:[#allocation2 + $0x50] sm:$0xff]
    %v51 = vld [vmem:[#allocation2 + $0x58] sm:$0xff]
    %v52 = vld [vmem:[#allocation2 + $0x60] sm:$0xff]
    %v53 = vld [vmem:[#allocation2 + $0x68] sm:$0xff]
    %v54 = vld [vmem:[#allocation2 + $0x70] sm:$0xff]
    %v55 = vld [vmem:[#allocation2 + $0x78] sm:$0xff]
    %v56 = vlaneseq
    %v57 = vshrl.u32 %v56, 7
    %v58 = vsub.s32 0, %v57
    %v59 = vrot.slane %v38, %v58
    %v60 = vmul.f32 %v40, %v59
    %v61 = vmul.f32 %v41, %v59
    %v62 = vmul.f32 %v42, %v59
    %v63 = vmul.f32 %v43, %v59
    %v64 = vmul.f32 %v44, %v59
    %v65 = vmul.f32 %v45, %v59
    %v66 = vmul.f32 %v46, %v59
    %v67 = vmul.f32 %v47, %v59
    %v68 = vmul.f32 %v48, %v59
    %v69 = vmul.f32 %v49, %v59
    %v70 = vmul.f32 %v50, %v59
    %v71 = vmul.f32 %v51, %v59
    %v72 = vmul.f32 %v52, %v59
    %v73 = vmul.f32 %v53, %v59
    %v74 = vmul.f32 %v54, %v59
    %v75 = vmul.f32 %v55, %v59
    %v76 = vlaneseq
    %v77 = vshrl.u32 %v76, 7
    %v78 = vsub.s32 0, %v77
    %v79 = vrot.slane %v39, %v78
    %v80 = vadd.f32 %v60, %v79
    %v81 = vadd.f32 %v61, %v79
    %v82 = vadd.f32 %v62, %v79
    %v83 = vadd.f32 %v63, %v79
    %v84 = vadd.f32 %v64, %v79
    %v85 = vadd.f32 %v65, %v79
    %v86 = vadd.f32 %v66, %v79
    %v87 = vadd.f32 %v67, %v79
    %v88 = vadd.f32 %v68, %v79
    %v89 = vadd.f32 %v69, %v79
    %v90 = vadd.f32 %v70, %v79
    %v91 = vadd.f32 %v71, %v79
    %v92 = vadd.f32 %v72, %v79
    %v93 = vadd.f32 %v73, %v79
    %v94 = vadd.f32 %v74, %v79
    %v95 = vadd.f32 %v75, %v79
    %96 = vst [vmem:[#allocation7] sm:$0xff] %v80
    %97 = vst [vmem:[#allocation7 + $0x8] sm:$0xff] %v81
    %98 = vst [vmem:[#allocation7 + $0x10] sm:$0xff] %v82
    %99 = vst [vmem:[#allocation7 + $0x18] sm:$0xff] %v83
    %100 = vst [vmem:[#allocation7 + $0x20] sm:$0xff] %v84
    %101 = vst [vmem:[#allocation7 + $0x28] sm:$0xff] %v85
    %102 = vst [vmem:[#allocation7 + $0x30] sm:$0xff] %v86
    %103 = vst [vmem:[#allocation7 + $0x38] sm:$0xff] %v87
    %104 = vst [vmem:[#allocation7 + $0x40] sm:$0xff] %v88
    %105 = vst [vmem:[#allocation7 + $0x48] sm:$0xff] %v89
    %106 = vst [vmem:[#allocation7 + $0x50] sm:$0xff] %v90
    %107 = vst [vmem:[#allocation7 + $0x58] sm:$0xff] %v91
    %108 = vst [vmem:[#allocation7 + $0x60] sm:$0xff] %v92
    %109 = vst [vmem:[#allocation7 + $0x68] sm:$0xff] %v93
    %110 = vst [vmem:[#allocation7 + $0x70] sm:$0xff] %v94
    %111 = vst [vmem:[#allocation7 + $0x78] sm:$0xff] %v95
    // Predicated region
    $region18: #{residual_block_forward.9} parent=1 // pred_check
      _
    $region19: #{residual_block_forward.9} parent=1 // pred_check_branch
      %113 = sbr.rel (0) target = $region21
    $region20: #{residual_block_forward.9} parent=1 // pred_region
      %s115 = ssub.s32 2048, 2048
      %116 = vsyncadd [#allocation4], %s115
      %s117 = sshll.u32 [#allocation7], 4
      %s118 = int_to_ptr.vmem [resolvable:$true] %s117
      %123 = dma.vmem_to_hbm [thread:$0]  %s118, 2048, %s2, [#allocation4], 128, 128, 8
    $region21: #{residual_block_forward.9} parent=1 // pred_fallthru
      _
    // Predicated region
    $region22: #{residual_block_forward.9} parent=1 // pred_check
      _
    $region23: #{residual_block_forward.9} parent=1 // pred_check_branch
      %125 = sbr.rel (0) target = $region25
    $region24: #{residual_block_forward.9} parent=1 // pred_region
      %126 = dma.done [#allocation4], 2048
    $region25: #{residual_block_forward.9} parent=1 // pred_fallthru
      _
    %127 = vsyncpa [#allocation3], 1
    %128 = vsyncpa [#allocation6], 1
    %129 = vsyncpa [#allocation4], 1

// kernel: residual_block_forward.8
$region0: #{residual_block_forward.8}
  #allocation0 [shape = 'u32[]', space=smem, size = 0x4, offset = 0x4, fixed_abs, tag = 'smem constant byte address 0x4 - core index']
  #allocation1 [shape = 'u32[144,128]{1,0:T(1,128)}', space=vmem, size = 0x12000, scoped, tag = 'internal scratch']
  %s0 = inlined_call_operand.hbm [shape: bf16[128,4], index: 0, kind: input, shape index: {}]
  %s1 = inlined_call_operand.hbm [shape: bf16[4,128], index: 1, kind: input, shape index: {}]
  %s2 = inlined_call_operand.hbm [shape: f32[128,128], index: 2, kind: output, shape index: {0}]
  %s3 = inlined_call_operand.hbm [shape: f32[1,128], index: 3, kind: output, shape index: {1}]
  %s4 = inlined_call_operand.hbm [shape: f32[1,128], index: 4, kind: output, shape index: {2}]
  %5 = xla_tuple %s2, %s3, %s4
  %s6 = sld [smem:[#allocation0]]
  $region46: #{residual_block_forward.8} parent=0
    _
  %s8 = ssub.s32 1, %s6
  %s9 = scalar_select 0, %s8, %s6
  $region1: #{residual_block_forward.8} parent=0
    #allocation2 [shape = 'u8[32768]{0}', space=vmem, size = 0x8000, scoped, tag = 'input window, operand 0, single buffered']
    #allocation3 [shape = 's32[1]{0}', space=sflag, size = 0x4, scoped, tag = 'scoped memory for residual_block_forward.8']
    #allocation4 [shape = 's32[1]{0}', space=sflag, size = 0x4, scoped, tag = 'scoped memory for residual_block_forward.8']
    #allocation5 [shape = 'u8[1024]{0}', space=vmem, size = 0x400, scoped, tag = 'input window, operand 1, single buffered']
    #allocation6 [shape = 's32[1]{0}', space=sflag, size = 0x4, scoped, tag = 'scoped memory for residual_block_forward.8']
    #allocation7 [shape = 'u8[65536]{0}', space=vmem, size = 0x10000, scoped, tag = 'output window, operand 0, single buffered']
    #allocation8 [shape = 'u8[512]{0}', space=vmem, size = 0x400, scoped, tag = 'output window, operand 1, single buffered']
    #allocation9 [shape = 's32[1]{0}', space=sflag, size = 0x4, scoped, tag = 'scoped memory for residual_block_forward.8']
    #allocation10 [shape = 'u8[512]{0}', space=vmem, size = 0x400, scoped, tag = 'output window, operand 2, single buffered']
    %10 = vsyncpa [#allocation3], 0
    %11 = vsyncpa [#allocation6], 0
    %12 = vsyncpa [#allocation4], 0
    %13 = vsyncpa [#allocation9], 0
    // Predicated region
    $region2: #{residual_block_forward.8} parent=1 // pred_check
      _
    $region3: #{residual_block_forward.8} parent=1 // pred_check_branch
      %15 = sbr.rel (0) target = $region5
    $region4: #{residual_block_forward.8} parent=1 // pred_region
      %s17 = ssub.s32 1024, 1024
      %18 = vsyncadd [#allocation3], %s17
      %s19 = sshll.u32 [#allocation2], 4
      %s20 = int_to_ptr.vmem [resolvable:$true] %s19
      %25 = dma.hbm_to_vmem [thread:$0]  %s0, 1024, %s20, [#allocation3], 64, 64, 4
    $region5: #{residual_block_forward.8} parent=1 // pred_fallthru
      _
    // Predicated region
    $region6: #{residual_block_forward.8} parent=1 // pred_check
      _
    $region7: #{residual_block_forward.8} parent=1 // pred_check_branch
      %27 = sbr.rel (0) target = $region9
    $region8: #{residual_block_forward.8} parent=1 // pred_region
      %s29 = ssub.s32 32, 32
      %30 = vsyncadd [#allocation6], %s29
      %s32 = sshll.u32 [#allocation5], 4
      %s33 = int_to_ptr.vmem [resolvable:$true] %s32
      %35 = dma.hbm_to_vmem [thread:$0]  %s1, 32, %s33, [#allocation6]
    $region9: #{residual_block_forward.8} parent=1 // pred_fallthru
      _
    // Predicated region
    $region10: #{residual_block_forward.8} parent=1 // pred_check
      _
    $region11: #{residual_block_forward.8} parent=1 // pred_check_branch
      %37 = sbr.rel (0) target = $region13
    $region12: #{residual_block_forward.8} parent=1 // pred_region
      %38 = dma.done [#allocation3], 1024
    $region13: #{residual_block_forward.8} parent=1 // pred_fallthru
      _
    // Predicated region
    $region14: #{residual_block_forward.8} parent=1 // pred_check
      _
    $region15: #{residual_block_forward.8} parent=1 // pred_check_branch
      %40 = sbr.rel (0) target = $region17
    $region16: #{residual_block_forward.8} parent=1 // pred_region
      %41 = dma.done [#allocation6], 32
    $region17: #{residual_block_forward.8} parent=1 // pred_fallthru
      _
    %v43 = vld [vmem:[#allocation2] sm:$0xf]
    %v44 = vld [vmem:[#allocation2 + $0x4] sm:$0xf]
    %v45 = vld [vmem:[#allocation2 + $0x8] sm:$0xf]
    %v46 = vld [vmem:[#allocation2 + $0xc] sm:$0xf]
    %v47 = vld [vmem:[#allocation2 + $0x10] sm:$0xf]
    %v48 = vld [vmem:[#allocation2 + $0x14] sm:$0xf]
    %v49 = vld [vmem:[#allocation2 + $0x18] sm:$0xf]
    %v50 = vld [vmem:[#allocation2 + $0x1c] sm:$0xf]
    %v51 = vld [vmem:[#allocation2 + $0x20] sm:$0xf]
    %v52 = vld [vmem:[#allocation2 + $0x24] sm:$0xf]
    %v53 = vld [vmem:[#allocation2 + $0x28] sm:$0xf]
    %v54 = vld [vmem:[#allocation2 + $0x2c] sm:$0xf]
    %v55 = vld [vmem:[#allocation2 + $0x30] sm:$0xf]
    %v56 = vld [vmem:[#allocation2 + $0x34] sm:$0xf]
    %v57 = vld [vmem:[#allocation2 + $0x38] sm:$0xf]
    %v58 = vld [vmem:[#allocation2 + $0x3c] sm:$0xf]
    %v59 = vld [vmem:[#allocation5] sm:$0x3]
    %v76 = vunpack.c.l.b16 %v43
    %v77 = vunpack.c.l.b16 %v44
    %v78 = vunpack.c.l.b16 %v45
    %v79 = vunpack.c.l.b16 %v46
    %v80 = vunpack.c.l.b16 %v47
    %v81 = vunpack.c.l.b16 %v48
    %v82 = vunpack.c.l.b16 %v49
    %v83 = vunpack.c.l.b16 %v50
    %v84 = vunpack.c.l.b16 %v51
    %v85 = vunpack.c.l.b16 %v52
    %v86 = vunpack.c.l.b16 %v53
    %v87 = vunpack.c.l.b16 %v54
    %v88 = vunpack.c.l.b16 %v55
    %v89 = vunpack.c.l.b16 %v56
    %v90 = vunpack.c.l.b16 %v57
    %v91 = vunpack.c.l.b16 %v58
    %v92 = vpack.c.b16 %v77, %v76
    %v93 = vpack.c.b16 %v79, %v78
    %v94 = vpack.c.b16 %v81, %v80
    %v95 = vpack.c.b16 %v83, %v82
    %v96 = vpack.c.b16 %v85, %v84
    %v97 = vpack.c.b16 %v87, %v86
    %v98 = vpack.c.b16 %v89, %v88
    %v99 = vpack.c.b16 %v91, %v90
    %vm100 = vcmask 31744
    %v102 = vsel %vm100, %v92, 0
    %v105 = vsel %vm100, %v93, 0
    %v108 = vsel %vm100, %v94, 0
    %v111 = vsel %vm100, %v95, 0
    %v114 = vsel %vm100, %v96, 0
    %v117 = vsel %vm100, %v97, 0
    %v120 = vsel %vm100, %v98, 0
    %v123 = vsel %vm100, %v99, 0
    %vm125 = vcmask 1041408
    %v127 = vsel %vm125, %v59, 0
    %129 = vmatprep.subr.bf16.mxu0 0
    %130 = vmatpush1.bf16.msra.mxu0 %v127
    %131 = vmatprep.subr.bf16.mxu0 0
    %132 = vmatpush1.bf16.msra.mxu0 0
    %133 = vmatprep.subr.bf16.mxu0 0
    %134 = vmatpush1.bf16.msra.mxu0 0
    %135 = vmatprep.subr.bf16.mxu0 0
    %136 = vmatpush1.bf16.msra.mxu0 0
    %137 = vmatprep.subr.bf16.mxu0 0
    %138 = vmatpush1.bf16.msra.mxu0 0
    %139 = vmatprep.subr.bf16.mxu0 0
    %140 = vmatpush1.bf16.msra.mxu0 0
    %141 = vmatprep.subr.bf16.mxu0 0
    %142 = vmatpush1.bf16.msra.mxu0 0
    %143 = vmatprep.subr.bf16.mxu0 0
    %144 = vmatpush1.bf16.msra.mxu0 0
    %145 = vmatprep.subr.bf16.mxu0 0
    %146 = vmatpush1.bf16.msra.mxu0 0
    %147 = vmatprep.subr.bf16.mxu0 0
    %148 = vmatpush1.bf16.msra.mxu0 0
    %149 = vmatprep.subr.bf16.mxu0 0
    %150 = vmatpush1.bf16.msra.mxu0 0
    %151 = vmatprep.subr.bf16.mxu0 0
    %152 = vmatpush1.bf16.msra.mxu0 0
    %153 = vmatprep.subr.bf16.mxu0 0
    %154 = vmatpush1.bf16.msra.mxu0 0
    %155 = vmatprep.subr.bf16.mxu0 0
    %156 = vmatpush1.bf16.msra.mxu0 0
    %157 = vmatprep.subr.bf16.mxu0 0
    %158 = vmatpush1.bf16.msra.mxu0 0
    %159 = vmatprep.subr.bf16.mxu0 0
    %160 = vmatpush1.bf16.msra.mxu0 0
    %161 = vmatprep.mubr.bf16.mxu0 0
    %162 = vmatmul.mubr.bf16.gmra.mrb[0].mxu0 %v102
    %v163 = vpop.f32.mrb[0].mxu0
    %v164 = vadd.f32 0.0, %v163
    %v165 = vpop.f32.mrb[0].mxu0
    %v166 = vpop.f32.mrb[0].mxu0
    %v167 = vadd.f32 0.0, %v166
    %v168 = vpop.f32.mrb[0].mxu0
    %169 = vmatprep.mubr.bf16.mxu0 0
    %170 = vmatmul.mubr.bf16.gmra.mrb[0].mxu0 %v105
    %v171 = vpop.f32.mrb[0].mxu0
    %v172 = vadd.f32 0.0, %v171
    %v173 = vpop.f32.mrb[0].mxu0
    %v174 = vpop.f32.mrb[0].mxu0
    %v175 = vadd.f32 0.0, %v174
    %v176 = vpop.f32.mrb[0].mxu0
    %177 = vmatprep.mubr.bf16.mxu0 0
    %178 = vmatmul.mubr.bf16.gmra.mrb[0].mxu0 %v108
    %v179 = vpop.f32.mrb[0].mxu0
    %v180 = vadd.f32 0.0, %v179
    %v181 = vpop.f32.mrb[0].mxu0
    %v182 = vpop.f32.mrb[0].mxu0
    %v183 = vadd.f32 0.0, %v182
    %v184 = vpop.f32.mrb[0].mxu0
    %185 = vmatprep.mubr.bf16.mxu0 0
    %186 = vmatmul.mubr.bf16.gmra.mrb[0].mxu0 %v111
    %v187 = vpop.f32.mrb[0].mxu0
    %v188 = vadd.f32 0.0, %v187
    %v189 = vpop.f32.mrb[0].mxu0
    %v190 = vpop.f32.mrb[0].mxu0
    %v191 = vadd.f32 0.0, %v190
    %v192 = vpop.f32.mrb[0].mxu0
    %193 = vmatprep.mubr.bf16.mxu0 0
    %194 = vmatmul.mubr.bf16.gmra.mrb[0].mxu0 %v114
    %v195 = vpop.f32.mrb[0].mxu0
    %v196 = vadd.f32 0.0, %v195
    %v197 = vpop.f32.mrb[0].mxu0
    %v198 = vpop.f32.mrb[0].mxu0
    %v199 = vadd.f32 0.0, %v198
    %v200 = vpop.f32.mrb[0].mxu0
    %201 = vmatprep.mubr.bf16.mxu0 0
    %202 = vmatmul.mubr.bf16.gmra.mrb[0].mxu0 %v117
    %v203 = vpop.f32.mrb[0].mxu0
    %v204 = vadd.f32 0.0, %v203
    %v205 = vpop.f32.mrb[0].mxu0
    %v206 = vpop.f32.mrb[0].mxu0
    %v207 = vadd.f32 0.0, %v206
    %v208 = vpop.f32.mrb[0].mxu0
    %209 = vmatprep.mubr.bf16.mxu0 0
    %210 = vmatmul.mubr.bf16.gmra.mrb[0].mxu0 %v120
    %v211 = vpop.f32.mrb[0].mxu0
    %v212 = vadd.f32 0.0, %v211
    %v213 = vpop.f32.mrb[0].mxu0
    %v214 = vpop.f32.mrb[0].mxu0
    %v215 = vadd.f32 0.0, %v214
    %v216 = vpop.f32.mrb[0].mxu0
    %217 = vmatprep.mubr.bf16.mxu0 0
    %218 = vmatmul.mubr.bf16.gmra.mrb[0].mxu0 %v123
    %v219 = vpop.f32.mrb[0].mxu0
    %v220 = vadd.f32 0.0, %v219
    %v221 = vpop.f32.mrb[0].mxu0
    %v222 = vpop.f32.mrb[0].mxu0
    %v223 = vadd.f32 0.0, %v222
    %v224 = vpop.f32.mrb[0].mxu0
    %225 = vdwg.mxu0
    %226 = vst [vmem:[#allocation7] sm:$0xff] %v164
    %227 = vst [vmem:[#allocation7 + $0x8] sm:$0xff] %v167
    %228 = vst [vmem:[#allocation7 + $0x10] sm:$0xff] %v172
    %229 = vst [vmem:[#allocation7 + $0x18] sm:$0xff] %v175
    %230 = vst [vmem:[#allocation7 + $0x20] sm:$0xff] %v180
    %231 = vst [vmem:[#allocation7 + $0x28] sm:$0xff] %v183
    %232 = vst [vmem:[#allocation7 + $0x30] sm:$0xff] %v188
    %233 = vst [vmem:[#allocation7 + $0x38] sm:$0xff] %v191
    %234 = vst [vmem:[#allocation7 + $0x40] sm:$0xff] %v196
    %235 = vst [vmem:[#allocation7 + $0x48] sm:$0xff] %v199
    %236 = vst [vmem:[#allocation7 + $0x50] sm:$0xff] %v204
    %237 = vst [vmem:[#allocation7 + $0x58] sm:$0xff] %v207
    %238 = vst [vmem:[#allocation7 + $0x60] sm:$0xff] %v212
    %239 = vst [vmem:[#allocation7 + $0x68] sm:$0xff] %v215
    %240 = vst [vmem:[#allocation7 + $0x70] sm:$0xff] %v220
    %241 = vst [vmem:[#allocation7 + $0x78] sm:$0xff] %v223
    %p242 = scmp.eq.s32.totalorder 0, 0
    // Predicated region
    $region18: #{residual_block_forward.8} parent=1 // pred_check
      %p243 = pneg %p242
    $region19: #{residual_block_forward.8} parent=1 // pred_check_branch
      %245 = sbr.rel (%p243) target = $region21
    $region20: #{residual_block_forward.8} parent=1 // pred_region
      %246 = vst [vmem:[#allocation8] sm:$0x1] 0.0
      %247 = vst [vmem:[#allocation10] sm:$0x1] 0.0
    $region21: #{residual_block_forward.8} parent=1 // pred_fallthru
      _
    %v248 = vld [vmem:[#allocation8] sm:$0x1]
    %v249 = vadd.f32 %v164, %v167
    %v250 = vadd.f32 %v249, %v172
    %v251 = vadd.f32 %v250, %v175
    %v252 = vadd.f32 %v251, %v180
    %v253 = vadd.f32 %v252, %v183
    %v254 = vadd.f32 %v253, %v188
    %v255 = vadd.f32 %v254, %v191
    %v256 = vadd.f32 %v255, %v196
    %v257 = vadd.f32 %v256, %v199
    %v258 = vadd.f32 %v257, %v204
    %v259 = vadd.f32 %v258, %v207
    %v260 = vadd.f32 %v259, %v212
    %v261 = vadd.f32 %v260, %v215
    %v262 = vadd.f32 %v261, %v220
    %v263 = vadd.f32 %v262, %v223
    %v264 = vrot.slane %v263, 4
    %v265 = vadd.f32 %v263, %v264
    %v266 = vrot.slane %v265, 2
    %v267 = vadd.f32 %v265, %v266
    %v268 = vrot.slane %v267, 1
    %v269 = vadd.f32 %v267, %v268
    %v270 = vadd.f32 %v248, %v269
    %271 = vst [vmem:[#allocation8] sm:$0x1] %v270
    %v272 = vld [vmem:[#allocation10] sm:$0x1]
    %v273 = vmul.f32 %v164, %v164
    %v274 = vmul.f32 %v167, %v167
    %v275 = vmul.f32 %v172, %v172
    %v276 = vmul.f32 %v175, %v175
    %v277 = vmul.f32 %v180, %v180
    %v278 = vmul.f32 %v183, %v183
    %v279 = vmul.f32 %v188, %v188
    %v280 = vmul.f32 %v191, %v191
    %v281 = vmul.f32 %v196, %v196
    %v282 = vmul.f32 %v199, %v199
    %v283 = vmul.f32 %v204, %v204
    %v284 = vmul.f32 %v207, %v207
    %v285 = vmul.f32 %v212, %v212
    %v286 = vmul.f32 %v215, %v215
    %v287 = vmul.f32 %v220, %v220
    %v288 = vmul.f32 %v223, %v223
    %v289 = vadd.f32 %v273, %v274
    %v290 = vadd.f32 %v289, %v275
    %v291 = vadd.f32 %v290, %v276
    %v292 = vadd.f32 %v291, %v277
    %v293 = vadd.f32 %v292, %v278
    %v294 = vadd.f32 %v293, %v279
    %v295 = vadd.f32 %v294, %v280
    %v296 = vadd.f32 %v295, %v281
    %v297 = vadd.f32 %v296, %v282
    %v298 = vadd.f32 %v297, %v283
    %v299 = vadd.f32 %v298, %v284
    %v300 = vadd.f32 %v299, %v285
    %v301 = vadd.f32 %v300, %v286
    %v302 = vadd.f32 %v301, %v287
    %v303 = vadd.f32 %v302, %v288
    %v304 = vrot.slane %v303, 4
    %v305 = vadd.f32 %v303, %v304
    %v306 = vrot.slane %v305, 2
    %v307 = vadd.f32 %v305, %v306
    %v308 = vrot.slane %v307, 1
    %v309 = vadd.f32 %v307, %v308
    %v310 = vadd.f32 %v272, %v309
    %311 = vst [vmem:[#allocation10] sm:$0x1] %v310
    // Predicated region
    $region22: #{residual_block_forward.8} parent=1 // pred_check
      _
    $region23: #{residual_block_forward.8} parent=1 // pred_check_branch
      %313 = sbr.rel (0) target = $region25
    $region24: #{residual_block_forward.8} parent=1 // pred_region
      %s315 = ssub.s32 2048, 2048
      %316 = vsyncadd [#allocation4], %s315
      %s317 = sshll.u32 [#allocation7], 4
      %s318 = int_to_ptr.vmem [resolvable:$true] %s317
      %323 = dma.vmem_to_hbm [thread:$0]  %s318, 2048, %s2, [#allocation4], 128, 128, 8
    $region25: #{residual_block_forward.8} parent=1 // pred_fallthru
      _
    // Predicated region
    $region26: #{residual_block_forward.8} parent=1 // pred_check
      _
    $region27: #{residual_block_forward.8} parent=1 // pred_check_branch
      %325 = sbr.rel (0) target = $region29
    $region28: #{residual_block_forward.8} parent=1 // pred_region
      %s327 = ssub.s32 16, 16
      %328 = vsyncadd [#allocation9], %s327
      %s330 = sshll.u32 [#allocation8], 4
      %s331 = int_to_ptr.vmem [resolvable:$true] %s330
      %333 = dma.vmem_to_hbm [thread:$0]  %s331, 16, %s3, [#allocation9]
    $region29: #{residual_block_forward.8} parent=1 // pred_fallthru
      _
    // Predicated region
    $region30: #{residual_block_forward.8} parent=1 // pred_check
      _
    $region31: #{residual_block_forward.8} parent=1 // pred_check_branch
      %335 = sbr.rel (0) target = $region33
    $region32: #{residual_block_forward.8} parent=1 // pred_region
      %s337 = ssub.s32 16, 16
      %338 = vsyncadd [#allocation9], %s337
      %s340 = sshll.u32 [#allocation10], 4
      %s341 = int_to_ptr.vmem [resolvable:$true] %s340
      %343 = dma.vmem_to_hbm [thread:$0]  %s341, 16, %s4, [#allocation9]
    $region33: #{residual_block_forward.8} parent=1 // pred_fallthru
      _
    // Predicated region
    $region34: #{residual_block_forward.8} parent=1 // pred_check
      _
    $region35: #{residual_block_forward.8} parent=1 // pred_check_branch
      %345 = sbr.rel (0) target = $region37
    $region36: #{residual_block_forward.8} parent=1 // pred_region
      %346 = dma.done [#allocation4], 2048
    $region37: #{residual_block_forward.8} parent=1 // pred_fallthru
      _
    // Predicated region
    $region38: #{residual_block_forward.8} parent=1 // pred_check
      _
    $region39: #{residual_block_forward.8} parent=1 // pred_check_branch
      %348 = sbr.rel (0) target = $region41
    $region40: #{residual_block_forward.8} parent=1 // pred_region
      %349 = dma.done [#allocation9], 16
    $region41: #{residual_block_forward.8} parent=1 // pred_fallthru
      _
    // Predicated region
    $region42: #{residual_block_forward.8} parent=1 // pred_check
      _
    $region43: #{residual_block_forward.8} parent=1 // pred_check_branch
      %351 = sbr.rel (0) target = $region45
    $region44: #{residual_block_forward.8} parent=1 // pred_region
      %352 = dma.done [#allocation9], 16
    $region45: #{residual_block_forward.8} parent=1 // pred_fallthru
      _
    %353 = vsyncpa [#allocation3], 1
    %354 = vsyncpa [#allocation6], 1
    %355 = vsyncpa [#allocation4], 1
    %356 = vsyncpa [#allocation9], 1

// kernel: residual_block_forward.11
$region0: #{residual_block_forward.11}
  #allocation0 [shape = 'u32[]', space=smem, size = 0x4, offset = 0x4, fixed_abs, tag = 'smem constant byte address 0x4 - core index']
  #allocation1 [shape = 'u32[144,128]{1,0:T(1,128)}', space=vmem, size = 0x12000, scoped, tag = 'internal scratch']
  %s0 = inlined_call_operand.hbm [shape: f32[128,128], index: 0, kind: input, shape index: {}]
  %s1 = inlined_call_operand.hbm [shape: f32[8,128], index: 1, kind: input, shape index: {}]
  %s2 = inlined_call_operand.hbm [shape: f32[128,128], index: 2, kind: input, shape index: {}]
  %s3 = inlined_call_operand.hbm [shape: f32[128,128], index: 3, kind: output, shape index: {}]
  %s4 = sld [smem:[#allocation0]]
  $region34: #{residual_block_forward.11} parent=0
    _
  %s6 = ssub.s32 1, %s4
  %s7 = scalar_select 0, %s6, %s4
  $region1: #{residual_block_forward.11} parent=0
    #allocation2 [shape = 'u8[65536]{0}', space=vmem, size = 0x10000, scoped, tag = 'input window, operand 0, single buffered']
    #allocation3 [shape = 's32[1]{0}', space=sflag, size = 0x4, scoped, tag = 'scoped memory for residual_block_forward.11']
    #allocation4 [shape = 's32[1]{0}', space=sflag, size = 0x4, scoped, tag = 'scoped memory for residual_block_forward.11']
    #allocation5 [shape = 'u8[4096]{0}', space=vmem, size = 0x1000, scoped, tag = 'input window, operand 1, single buffered']
    #allocation6 [shape = 's32[1]{0}', space=sflag, size = 0x4, scoped, tag = 'scoped memory for residual_block_forward.11']
    #allocation7 [shape = 'u8[65536]{0}', space=vmem, size = 0x10000, scoped, tag = 'input window, operand 2, single buffered']
    #allocation8 [shape = 'u8[65536]{0}', space=vmem, size = 0x10000, scoped, tag = 'output window, operand 0, single buffered']
    %8 = vsyncpa [#allocation3], 0
    %9 = vsyncpa [#allocation6], 0
    %10 = vsyncpa [#allocation4], 0
    // Predicated region
    $region2: #{residual_block_forward.11} parent=1 // pred_check
      _
    $region3: #{residual_block_forward.11} parent=1 // pred_check_branch
      %12 = sbr.rel (0) target = $region5
    $region4: #{residual_block_forward.11} parent=1 // pred_region
      %s14 = ssub.s32 2048, 2048
      %15 = vsyncadd [#allocation3], %s14
      %s16 = sshll.u32 [#allocation2], 4
      %s17 = int_to_ptr.vmem [resolvable:$true] %s16
      %22 = dma.hbm_to_vmem [thread:$0]  %s0, 2048, %s17, [#allocation3], 128, 128, 8
    $region5: #{residual_block_forward.11} parent=1 // pred_fallthru
      _
    // Predicated region
    $region6: #{residual_block_forward.11} parent=1 // pred_check
      _
    $region7: #{residual_block_forward.11} parent=1 // pred_check_branch
      %24 = sbr.rel (0) target = $region9
    $region8: #{residual_block_forward.11} parent=1 // pred_region
      %s26 = ssub.s32 128, 128
      %27 = vsyncadd [#allocation6], %s26
      %s29 = sshll.u32 [#allocation5], 4
      %s30 = int_to_ptr.vmem [resolvable:$true] %s29
      %32 = dma.hbm_to_vmem [thread:$0]  %s1, 128, %s30, [#allocation6]
    $region9: #{residual_block_forward.11} parent=1 // pred_fallthru
      _
    // Predicated region
    $region10: #{residual_block_forward.11} parent=1 // pred_check
      _
    $region11: #{residual_block_forward.11} parent=1 // pred_check_branch
      %34 = sbr.rel (0) target = $region13
    $region12: #{residual_block_forward.11} parent=1 // pred_region
      %s36 = ssub.s32 2048, 2048
      %37 = vsyncadd [#allocation6], %s36
      %s38 = sshll.u32 [#allocation7], 4
      %s39 = int_to_ptr.vmem [resolvable:$true] %s38
      %44 = dma.hbm_to_vmem [thread:$0]  %s2, 2048, %s39, [#allocation6], 128, 128, 8
    $region13: #{residual_block_forward.11} parent=1 // pred_fallthru
      _
    // Predicated region
    $region14: #{residual_block_forward.11} parent=1 // pred_check
      _
    $region15: #{residual_block_forward.11} parent=1 // pred_check_branch
      %46 = sbr.rel (0) target = $region17
    $region16: #{residual_block_forward.11} parent=1 // pred_region
      %47 = dma.done [#allocation3], 2048
    $region17: #{residual_block_forward.11} parent=1 // pred_fallthru
      _
    // Predicated region
    $region18: #{residual_block_forward.11} parent=1 // pred_check
      _
    $region19: #{residual_block_forward.11} parent=1 // pred_check_branch
      %49 = sbr.rel (0) target = $region21
    $region20: #{residual_block_forward.11} parent=1 // pred_region
      %50 = dma.done [#allocation6], 128
    $region21: #{residual_block_forward.11} parent=1 // pred_fallthru
      _
    // Predicated region
    $region22: #{residual_block_forward.11} parent=1 // pred_check
      _
    $region23: #{residual_block_forward.11} parent=1 // pred_check_branch
      %52 = sbr.rel (0) target = $region25
    $region24: #{residual_block_forward.11} parent=1 // pred_region
      %53 = dma.done [#allocation6], 2048
    $region25: #{residual_block_forward.11} parent=1 // pred_fallthru
      _
    %v54 = vld [vmem:[#allocation5] sm:$0x1]
    %v55 = vld [vmem:[#allocation5 + $0x1] sm:$0x1]
    %v56 = vld [vmem:[#allocation2] sm:$0xff]
    %v57 = vld [vmem:[#allocation2 + $0x8] sm:$0xff]
    %v58 = vld [vmem:[#allocation2 + $0x10] sm:$0xff]
    %v59 = vld [vmem:[#allocation2 + $0x18] sm:$0xff]
    %v60 = vld [vmem:[#allocation2 + $0x20] sm:$0xff]
    %v61 = vld [vmem:[#allocation2 + $0x28] sm:$0xff]
    %v62 = vld [vmem:[#allocation2 + $0x30] sm:$0xff]
    %v63 = vld [vmem:[#allocation2 + $0x38] sm:$0xff]
    %v64 = vld [vmem:[#allocation2 + $0x40] sm:$0xff]
    %v65 = vld [vmem:[#allocation2 + $0x48] sm:$0xff]
    %v66 = vld [vmem:[#allocation2 + $0x50] sm:$0xff]
    %v67 = vld [vmem:[#allocation2 + $0x58] sm:$0xff]
    %v68 = vld [vmem:[#allocation2 + $0x60] sm:$0xff]
    %v69 = vld [vmem:[#allocation2 + $0x68] sm:$0xff]
    %v70 = vld [vmem:[#allocation2 + $0x70] sm:$0xff]
    %v71 = vld [vmem:[#allocation2 + $0x78] sm:$0xff]
    %v72 = vlaneseq
    %v73 = vshrl.u32 %v72, 7
    %v74 = vsub.s32 0, %v73
    %v75 = vrot.slane %v54, %v74
    %v76 = vmul.f32 %v56, %v75
    %v77 = vmul.f32 %v57, %v75
    %v78 = vmul.f32 %v58, %v75
    %v79 = vmul.f32 %v59, %v75
    %v80 = vmul.f32 %v60, %v75
    %v81 = vmul.f32 %v61, %v75
    %v82 = vmul.f32 %v62, %v75
    %v83 = vmul.f32 %v63, %v75
    %v84 = vmul.f32 %v64, %v75
    %v85 = vmul.f32 %v65, %v75
    %v86 = vmul.f32 %v66, %v75
    %v87 = vmul.f32 %v67, %v75
    %v88 = vmul.f32 %v68, %v75
    %v89 = vmul.f32 %v69, %v75
    %v90 = vmul.f32 %v70, %v75
    %v91 = vmul.f32 %v71, %v75
    %v92 = vlaneseq
    %v93 = vshrl.u32 %v92, 7
    %v94 = vsub.s32 0, %v93
    %v95 = vrot.slane %v55, %v94
    %v96 = vadd.f32 %v76, %v95
    %v97 = vadd.f32 %v77, %v95
    %v98 = vadd.f32 %v78, %v95
    %v99 = vadd.f32 %v79, %v95
    %v100 = vadd.f32 %v80, %v95
    %v101 = vadd.f32 %v81, %v95
    %v102 = vadd.f32 %v82, %v95
    %v103 = vadd.f32 %v83, %v95
    %v104 = vadd.f32 %v84, %v95
    %v105 = vadd.f32 %v85, %v95
    %v106 = vadd.f32 %v86, %v95
    %v107 = vadd.f32 %v87, %v95
    %v108 = vadd.f32 %v88, %v95
    %v109 = vadd.f32 %v89, %v95
    %v110 = vadd.f32 %v90, %v95
    %v111 = vadd.f32 %v91, %v95
    %v112 = vld [vmem:[#allocation7] sm:$0xff]
    %v113 = vld [vmem:[#allocation7 + $0x8] sm:$0xff]
    %v114 = vld [vmem:[#allocation7 + $0x10] sm:$0xff]
    %v115 = vld [vmem:[#allocation7 + $0x18] sm:$0xff]
    %v116 = vld [vmem:[#allocation7 + $0x20] sm:$0xff]
    %v117 = vld [vmem:[#allocation7 + $0x28] sm:$0xff]
    %v118 = vld [vmem:[#allocation7 + $0x30] sm:$0xff]
    %v119 = vld [vmem:[#allocation7 + $0x38] sm:$0xff]
    %v120 = vld [vmem:[#allocation7 + $0x40] sm:$0xff]
    %v121 = vld [vmem:[#allocation7 + $0x48] sm:$0xff]
    %v122 = vld [vmem:[#allocation7 + $0x50] sm:$0xff]
    %v123 = vld [vmem:[#allocation7 + $0x58] sm:$0xff]
    %v124 = vld [vmem:[#allocation7 + $0x60] sm:$0xff]
    %v125 = vld [vmem:[#allocation7 + $0x68] sm:$0xff]
    %v126 = vld [vmem:[#allocation7 + $0x70] sm:$0xff]
    %v127 = vld [vmem:[#allocation7 + $0x78] sm:$0xff]
    %v128 = vadd.f32 %v96, %v112
    %v129 = vadd.f32 %v97, %v113
    %v130 = vadd.f32 %v98, %v114
    %v131 = vadd.f32 %v99, %v115
    %v132 = vadd.f32 %v100, %v116
    %v133 = vadd.f32 %v101, %v117
    %v134 = vadd.f32 %v102, %v118
    %v135 = vadd.f32 %v103, %v119
    %v136 = vadd.f32 %v104, %v120
    %v137 = vadd.f32 %v105, %v121
    %v138 = vadd.f32 %v106, %v122
    %v139 = vadd.f32 %v107, %v123
    %v140 = vadd.f32 %v108, %v124
    %v141 = vadd.f32 %v109, %v125
    %v142 = vadd.f32 %v110, %v126
    %v143 = vadd.f32 %v111, %v127
    %v144 = vmul.f32 %v128, 0.1
    %v145 = vmul.f32 %v129, 0.1
    %v146 = vmul.f32 %v130, 0.1
    %v147 = vmul.f32 %v131, 0.1
    %v148 = vmul.f32 %v132, 0.1
    %v149 = vmul.f32 %v133, 0.1
    %v150 = vmul.f32 %v134, 0.1
    %v151 = vmul.f32 %v135, 0.1
    %v152 = vmul.f32 %v136, 0.1
    %v153 = vmul.f32 %v137, 0.1
    %v154 = vmul.f32 %v138, 0.1
    %v155 = vmul.f32 %v139, 0.1
    %v156 = vmul.f32 %v140, 0.1
    %v157 = vmul.f32 %v141, 0.1
    %v158 = vmul.f32 %v142, 0.1
    %v159 = vmul.f32 %v143, 0.1
    %v160 = vmax.f32 %v128, %v144
    %v161 = vmax.f32 %v129, %v145
    %v162 = vmax.f32 %v130, %v146
    %v163 = vmax.f32 %v131, %v147
    %v164 = vmax.f32 %v132, %v148
    %v165 = vmax.f32 %v133, %v149
    %v166 = vmax.f32 %v134, %v150
    %v167 = vmax.f32 %v135, %v151
    %v168 = vmax.f32 %v136, %v152
    %v169 = vmax.f32 %v137, %v153
    %v170 = vmax.f32 %v138, %v154
    %v171 = vmax.f32 %v139, %v155
    %v172 = vmax.f32 %v140, %v156
    %v173 = vmax.f32 %v141, %v157
    %v174 = vmax.f32 %v142, %v158
    %v175 = vmax.f32 %v143, %v159
    %176 = vst [vmem:[#allocation8] sm:$0xff] %v160
    %177 = vst [vmem:[#allocation8 + $0x8] sm:$0xff] %v161
    %178 = vst [vmem:[#allocation8 + $0x10] sm:$0xff] %v162
    %179 = vst [vmem:[#allocation8 + $0x18] sm:$0xff] %v163
    %180 = vst [vmem:[#allocation8 + $0x20] sm:$0xff] %v164
    %181 = vst [vmem:[#allocation8 + $0x28] sm:$0xff] %v165
    %182 = vst [vmem:[#allocation8 + $0x30] sm:$0xff] %v166
    %183 = vst [vmem:[#allocation8 + $0x38] sm:$0xff] %v167
    %184 = vst [vmem:[#allocation8 + $0x40] sm:$0xff] %v168
    %185 = vst [vmem:[#allocation8 + $0x48] sm:$0xff] %v169
    %186 = vst [vmem:[#allocation8 + $0x50] sm:$0xff] %v170
    %187 = vst [vmem:[#allocation8 + $0x58] sm:$0xff] %v171
    %188 = vst [vmem:[#allocation8 + $0x60] sm:$0xff] %v172
    %189 = vst [vmem:[#allocation8 + $0x68] sm:$0xff] %v173
    %190 = vst [vmem:[#allocation8 + $0x70] sm:$0xff] %v174
    %191 = vst [vmem:[#allocation8 + $0x78] sm:$0xff] %v175
    // Predicated region
    $region26: #{residual_block_forward.11} parent=1 // pred_check
      _
    $region27: #{residual_block_forward.11} parent=1 // pred_check_branch
      %193 = sbr.rel (0) target = $region29
    $region28: #{residual_block_forward.11} parent=1 // pred_region
      %s195 = ssub.s32 2048, 2048
      %196 = vsyncadd [#allocation4], %s195
      %s197 = sshll.u32 [#allocation8], 4
      %s198 = int_to_ptr.vmem [resolvable:$true] %s197
      %203 = dma.vmem_to_hbm [thread:$0]  %s198, 2048, %s3, [#allocation4], 128, 128, 8
    $region29: #{residual_block_forward.11} parent=1 // pred_fallthru
      _
    // Predicated region
    $region30: #{residual_block_forward.11} parent=1 // pred_check
      _
    $region31: #{residual_block_forward.11} parent=1 // pred_check_branch
      %205 = sbr.rel (0) target = $region33
    $region32: #{residual_block_forward.11} parent=1 // pred_region
      %206 = dma.done [#allocation4], 2048
    $region33: #{residual_block_forward.11} parent=1 // pred_fallthru
      _
    %207 = vsyncpa [#allocation3], 1
    %208 = vsyncpa [#allocation6], 1
    %209 = vsyncpa [#allocation4], 1

</llo_original>
